<compile_context>
chip_gen: v5e
topology: v5e:2x2
jax: 0.10.0
libtpu: 0.0.40
codegen_flags: <defaults>
</compile_context>

<pallas_src>
import functools

import jax
import jax.numpy as jnp
from jax.experimental import pallas as pl
from jax.experimental.pallas import tpu as pltpu

NOISY_SIGMA_INIT = 0.5
USE_BF16_MATMUL = True        # bf16 MXU operands + bf16 inter-kernel activation
LANE = 128
SUBLANE = 8


def _round_up(x, m):
    return (x + m - 1) // m * m


def _vmem_limit_bytes():
    """Generation-aware VMEM budget: ~3/4 of physical (v7x TC = 64 MiB)."""
    try:
        cap = getattr(pltpu.get_tpu_info(), "vmem_capacity_bytes", None)
        if cap:
            return int(cap) * 3 // 4
    except Exception:
        pass
    return 48 * 1024 * 1024   # safe on every generation


# ---------------------------------------------------------------------------
# Pallas kernels
# ---------------------------------------------------------------------------
def conv_relu_kernel(p_ref, w_ref, b_ref, o_ref):
    """Grouped im2col conv: one lane-dense MXU matmul + bias + ReLU.

    p_ref: (TR, G*CKKp) bf16   w_ref: (G*CKKp, G*Cout) bf16 (block-diag, /255 folded)
    b_ref: (1, G*Cout)  f32    o_ref: (TR, G*Cout) bf16 (full 128-lane rows)
    Accumulation and bias/ReLU in f32 (v5e-safe); store casts to bf16.
    """
    acc = jnp.dot(p_ref[...], w_ref[...], preferred_element_type=jnp.float32)
    o_ref[...] = jnp.maximum(acc + b_ref[...], 0.0).astype(o_ref.dtype)


def dueling_head_kernel(f_ref, w1_ref, b1_ref, w2_ref, b2_ref, q_ref):
    """Fused dueling head — exactly two MXU matmuls, no cross-lane reduce.

    w1_ref: (feat, 1024) = [W1_value | W1_adv], rows pre-permuted to the conv
            kernel's (oh, ow, c) feature order (NCHW flatten folded in), bf16.
    w2_ref: (1024, 128) bf16 with the dueling combine FOLDED IN at prep time:
              cols 0..A-1 <- value column replicated + centered advantage
              (adv block post-multiplied by I - (1/A)*11^T), cols >= A zero.
    q_ref:  (B_tile, 128) f32 lane-dense; cols 0..A-1 are the Q-values,
            wrapper slices [:, :A].
    """
    h = jnp.dot(f_ref[...], w1_ref[...],
                preferred_element_type=jnp.float32) + b1_ref[...]
    h = jnp.maximum(h, 0.0)                                   # f32 elementwise
    q_ref[...] = jnp.dot(h.astype(w2_ref.dtype), w2_ref[...],
                         preferred_element_type=jnp.float32) + b2_ref[...]


# ---------------------------------------------------------------------------
# Glue: im2col (layout plumbing; column order (Cin, kh, kw) matches OIHW).
# Runs in the (narrow) matmul dtype so the expanded patch intermediate is 2B/elem.
# ---------------------------------------------------------------------------
def im2col(x, K, stride, pad):
    B, C, H, W = x.shape
    xp = jnp.pad(x, ((0, 0), (0, 0), (pad, pad), (pad, pad)))
    OH = (H + 2 * pad - K) // stride + 1
    OW = (W + 2 * pad - K) // stride + 1
    cols = []
    for kh in range(K):
        for kw in range(K):
            cols.append(xp[:, :, kh:kh + stride * OH:stride, kw:kw + stride * OW:stride])
    patches = jnp.stack(cols, axis=2)                    # (B, C, K*K, OH, OW)
    patches = patches.reshape(B, C * K * K, OH, OW)
    patches = patches.transpose(0, 2, 3, 1).reshape(B * OH * OW, C * K * K)
    return patches, OH, OW


# ---------------------------------------------------------------------------
# Parameter construction (deterministic, mirrors NoisyLinear.__init__)
# ---------------------------------------------------------------------------
def noisy_linear_params(key, in_f, out_f, sigma_init=NOISY_SIGMA_INIT):
    k1, k2, k3, k4 = jax.random.split(key, 4)
    bound = 1.0 / in_f ** 0.5
    w_mu = jax.random.uniform(k1, (out_f, in_f), jnp.float32, -bound, bound)
    w_sigma = jnp.full((out_f, in_f), sigma_init / in_f ** 0.5, jnp.float32)
    b_mu = jax.random.uniform(k2, (out_f,), jnp.float32, -bound, bound)
    b_sigma = jnp.full((out_f,), sigma_init / out_f ** 0.5, jnp.float32)
    f = lambda z: jnp.sign(z) * jnp.sqrt(jnp.abs(z))      # factorized noise
    eps_in = f(jax.random.normal(k3, (in_f,), jnp.float32))
    eps_out = f(jax.random.normal(k4, (out_f,), jnp.float32))
    w = w_mu + w_sigma * jnp.outer(eps_out, eps_in)       # training-mode weights
    b = b_mu + b_sigma * eps_out
    return w, b


# ---------------------------------------------------------------------------
# One-time parameter prep: /255 fold, padding, permutation folding, stream
# fusion, dueling-mean fold, bf16 cast of all MXU operands.
# ---------------------------------------------------------------------------
def prepare_params(input_shape, conv_w, conv_b,
                   w1v, b1v, w2v, b2v, w1a, b1a, w2a, b2a,
                   *, stride=2, pad=1, matmul_dtype=jnp.float32):
    C, H, W = input_shape
    Cout, Cin, K, _ = conv_w.shape
    assert Cin == C
    OH = (H + 2 * pad - K) // stride + 1
    OW = (W + 2 * pad - K) // stride + 1
    OHW = OH * OW

    CKK = C * K * K
    CKKp = _round_up(CKK, SUBLANE)            # pad contraction once, at prep time
    G = max(1, LANE // Cout)                  # spatial group -> 128-lane conv rows
    while OHW % G != 0 and G > 1:
        G //= 2

    # conv weight (with 1/255 input scaling folded in) -> (CKKp, Cout), then
    # block-diagonal over G spatial positions.  Bias is NOT scaled.
    wc = jnp.zeros((CKKp, Cout), jnp.float32).at[:CKK].set(
        (conv_w / 255.0).reshape(Cout, CKK).T)
    w_conv = jnp.kron(jnp.eye(G, dtype=jnp.float32), wc)   # (G*CKKp, G*Cout)
    b_conv = jnp.tile(conv_b, G).reshape(1, G * Cout)

    feat_dim = w1v.shape[1]
    assert feat_dim == Cout * OHW, (feat_dim, Cout, OHW)
    # Fold torch's NCHW flatten (index t = c*OHW + p) into the weight rows so
    # the kernel's (oh, ow, c) feature order (index k = p*Cout + c) needs no
    # transpose between the conv and head kernels.
    k_idx = jnp.arange(feat_dim)
    t_idx = (k_idx % Cout) * OHW + (k_idx // Cout)
    w1 = jnp.concatenate([w1v.T[t_idx], w1a.T[t_idx]], axis=1)   # (feat, 2H)
    b1 = jnp.concatenate([b1v, b1a]).reshape(1, -1)              # f32

    Hd = w1v.shape[0]                                            # 512
    A = w2a.shape[0]                                             # n_actions
    # Fold the dueling combine:  q_j = v + (adv_j - mean(adv))
    #   centered adv  = adv @ (I - (1/A) 11^T)  -> fold into adv weight/bias
    #   value stream  = replicate the value column into every action column
    center = jnp.eye(A, dtype=jnp.float32) - jnp.full((A, A), 1.0 / A, jnp.float32)
    w2a_c = w2a.T @ center                                   # (Hd, A)
    b2a_c = b2a @ center                                     # (A,)
    w2 = jnp.zeros((2 * Hd, LANE), jnp.float32)
    w2 = w2.at[:Hd, :A].set(jnp.tile(w2v.T, (1, A)))         # value, replicated
    w2 = w2.at[Hd:, :A].set(w2a_c)                           # centered advantage
    b2 = jnp.zeros((1, LANE), jnp.float32)
    b2 = b2.at[0, :A].set(b2v[0] + b2a_c)

    params = dict(w_conv=w_conv.astype(matmul_dtype), b_conv=b_conv,
                  w1=w1.astype(matmul_dtype), b1=b1,
                  w2=w2.astype(matmul_dtype), b2=b2)
    meta = dict(G=G, CKK=CKK, CKKp=CKKp, K=K, n_actions=A,
                feat_dim=feat_dim, matmul_dtype=matmul_dtype)
    return params, meta


# ---------------------------------------------------------------------------
# Forward
# ---------------------------------------------------------------------------
def dueling_dqn_forward(x, params, *, meta, stride=2, pad=1):
    B, C, H, W = x.shape
    G, CKK, CKKp = meta["G"], meta["CKK"], meta["CKKp"]
    K, n_actions, feat_dim = meta["K"], meta["n_actions"], meta["feat_dim"]
    mdt = meta["matmul_dtype"]
    vmem_limit = _vmem_limit_bytes()

    # /255 is folded into w_conv -> no scaling pass; only a narrow dtype cast,
    # so the im2col intermediate is half the bytes of the f32 version.
    xs = x.astype(mdt)
    patches, OH, OW = im2col(xs, K, stride, pad)               # (R, CKK)
    R = B * OH * OW
    assert R % G == 0
    patches = jnp.pad(patches, ((0, 0), (0, CKKp - CKK)))
    patches_g = patches.reshape(R // G, G * CKKp)              # free reshape

    RG = R // G
    GC = params["w_conv"].shape[1]                             # G*Cout (=128)
    # Row tile: full-dim when small (bf16 min-tile safe); else 1024 (mult of 16).
    TR = RG if RG <= 1024 else 1024

    w_conv, b_conv = params["w_conv"], params["b_conv"]
    conv_flops = 2 * RG * (G * CKKp) * GC
    conv_bytes = (patches_g.size * patches_g.dtype.itemsize
                  + w_conv.size * w_conv.dtype.itemsize + b_conv.size * 4
                  + RG * GC * jnp.dtype(mdt).itemsize)

    conv_out = pl.pallas_call(
        conv_relu_kernel,
        out_shape=jax.ShapeDtypeStruct((RG, GC), mdt),         # bf16 activation
        grid=(pl.cdiv(RG, TR),),
        in_specs=[pl.BlockSpec((TR, G * CKKp), lambda i: (i, 0)),
                  pl.BlockSpec((G * CKKp, GC), lambda i: (0, 0)),
                  pl.BlockSpec((1, GC), lambda i: (0, 0))],
        out_specs=pl.BlockSpec((TR, GC), lambda i: (i, 0)),
        compiler_params=pltpu.CompilerParams(
            dimension_semantics=("parallel",),
            vmem_limit_bytes=vmem_limit),
        cost_estimate=pl.CostEstimate(flops=int(conv_flops), transcendentals=0,
                                      bytes_accessed=int(conv_bytes)),
    )(patches_g, w_conv, b_conv)

    # NCHW flatten is folded into the head weights -> this is a free,
    # contiguous reshape (no transpose, no extra HBM copy), and stays bf16.
    feats = conv_out.reshape(B, feat_dim)

    # Batch tile: <=128 so real batches expose >=2 parallel steps (v7x 2 TCs).
    BT = B if B <= 128 else 128
    w1, b1, w2, b2 = params["w1"], params["b1"], params["w2"], params["b2"]
    flops = 2 * B * feat_dim * w1.shape[1] + 2 * B * w2.shape[0] * w2.shape[1]
    bytes_acc = (feats.size * feats.dtype.itemsize
                 + w1.size * w1.dtype.itemsize + w2.size * w2.dtype.itemsize
                 + b1.size * 4 + b2.size * 4 + B * LANE * 4)

    q_pad = pl.pallas_call(
        dueling_head_kernel,
        out_shape=jax.ShapeDtypeStruct((B, LANE), jnp.float32),
        grid=(pl.cdiv(B, BT),),
        in_specs=[pl.BlockSpec((BT, feat_dim), lambda i: (i, 0)),
                  pl.BlockSpec(w1.shape, lambda i: (0, 0)),
                  pl.BlockSpec(b1.shape, lambda i: (0, 0)),
                  pl.BlockSpec(w2.shape, lambda i: (0, 0)),
                  pl.BlockSpec(b2.shape, lambda i: (0, 0))],
        out_specs=pl.BlockSpec((BT, LANE), lambda i: (i, 0)),
        compiler_params=pltpu.CompilerParams(
            dimension_semantics=("parallel",),
            vmem_limit_bytes=vmem_limit),
        cost_estimate=pl.CostEstimate(flops=int(flops), transcendentals=0,
                                      bytes_accessed=int(bytes_acc)),
    )(feats, w1, b1, w2, b2)

    # cols 0..A-1 hold the Q-values (dueling combine folded into W2/b2).
    return q_pad[:, :n_actions]


# ---------------------------------------------------------------------------
# Pure-JAX reference: exact torch-equivalent f32 math (true-parity check).
# ---------------------------------------------------------------------------
def reference_forward(x, conv_w, conv_b, w1v, b1v, w2v, b2v, w1a, b1a, w2a, b2a):
    xs = x.astype(jnp.float32) / 255.0
    y = jax.lax.conv_general_dilated(
        xs, conv_w, window_strides=(2, 2), padding=((1, 1), (1, 1)),
        dimension_numbers=('NCHW', 'OIHW', 'NCHW'))
    y = jnp.maximum(y + conv_b.reshape(1, -1, 1, 1), 0.0)
    f = y.reshape(x.shape[0], -1)
    h_v = jnp.maximum(f @ w1v.T + b1v, 0.0)
    v = h_v @ w2v.T + b2v
    h_a = jnp.maximum(f @ w1a.T + b1a, 0.0)
    a = h_a @ w2a.T + b2a
    return v + (a - jnp.mean(a, axis=1, keepdims=True))


if __name__ == "__main__":
    B, C, H, W = 2, 4, 16, 16            # input_shape = (4, 16, 16)
    n_actions = 6
    Cout, K = 8, 3                       # simple Conv+ReLU feature extractor
    stride, padding = 2, 1
    OH = (H + 2 * padding - K) // stride + 1
    OW = (W + 2 * padding - K) // stride + 1
    feat_dim = Cout * OH * OW            # 8 * 8 * 8 = 512

    key = jax.random.PRNGKey(0)
    kx, kcw, kcb, kv1, kv2, ka1, ka2 = jax.random.split(key, 7)

    # deterministic "frame-like" input in [0, 255)
    x = jax.random.uniform(kx, (B, C, H, W), jnp.float32, 0.0, 255.0)

    # conv feature-extractor params (uniform +/- 1/sqrt(fan_in), torch default)
    cb = 1.0 / (C * K * K) ** 0.5
    conv_w = jax.random.uniform(kcw, (Cout, C, K, K), jnp.float32, -cb, cb)
    conv_b = jax.random.uniform(kcb, (Cout,), jnp.float32, -cb, cb)

    # NoisyLinear effective (training-mode) params
    w1v, b1v = noisy_linear_params(kv1, feat_dim, 512)
    w2v, b2v = noisy_linear_params(kv2, 512, 1)
    w1a, b1a = noisy_linear_params(ka1, feat_dim, 512)
    w2a, b2a = noisy_linear_params(ka2, 512, n_actions)

    matmul_dtype = jnp.bfloat16 if USE_BF16_MATMUL else jnp.float32
    params, meta = prepare_params(
        (C, H, W), conv_w, conv_b, w1v, b1v, w2v, b2v, w1a, b1a, w2a, b2a,
        stride=stride, pad=padding, matmul_dtype=matmul_dtype)

    fwd = jax.jit(functools.partial(dueling_dqn_forward, meta=meta,
                                    stride=stride, pad=padding))
    q = fwd(x, params)
    q = jax.block_until_ready(q)

    # Compare against the exact f32 PyTorch-equivalent math (tolerance sized
    # for the bf16 MXU-operand path; tight when running full f32).
    q_ref = reference_forward(x, conv_w, conv_b, w1v, b1v, w2v, b2v,
                              w1a, b1a, w2a, b2a)
    assert q.shape == (B, n_actions), q.shape
    tol = 3e-2 if USE_BF16_MATMUL else 2e-3
    assert jnp.allclose(q, q_ref, atol=tol, rtol=tol), \
        float(jnp.max(jnp.abs(q - q_ref)))

    print("KERNEL_OK")
</pallas_src>

<mosaic_0001>
module attributes {stable_mosaic.version = 11 : i64} {
  func.func @conv_relu_kernel(%arg0: i32, %arg1: memref<8x640xbf16, #tpu.memory_space<vmem>>, %arg2: memref<640x128xbf16, #tpu.memory_space<vmem>>, %arg3: memref<1x128xf32, #tpu.memory_space<vmem>>, %arg4: memref<8x128xbf16, #tpu.memory_space<vmem>>) attributes {dimension_semantics = [#tpu.dimension_semantics<parallel>], iteration_bounds = array<i64: 1>, scalar_prefetch = 0 : i64, scratch_operands = 0 : i64, tpu.core_type = #tpu.core_type<tc>, window_params = [{transform_indices = @transform_0, window_bounds = array<i64: 8, 640>}, {pipeline_mode = #tpu.pipeline_mode<synchronous>, transform_indices = @transform_1, window_bounds = array<i64: 640, 128>}, {pipeline_mode = #tpu.pipeline_mode<synchronous>, transform_indices = @transform_2, window_bounds = array<i64: 1, 128>}, {transform_indices = @transform_3, window_bounds = array<i64: 8, 128>}]} {
    %c0 = arith.constant 0 : index
    %c0_0 = arith.constant 0 : index
    %0 = vector.load %arg1[%c0, %c0_0] : memref<8x640xbf16, #tpu.memory_space<vmem>>, vector<8x640xbf16>
    %c0_1 = arith.constant 0 : index
    %c0_2 = arith.constant 0 : index
    %1 = vector.load %arg2[%c0_1, %c0_2] : memref<640x128xbf16, #tpu.memory_space<vmem>>, vector<640x128xbf16>
    %cst = arith.constant dense<0.000000e+00> : vector<8x128xf32>
    %2 = tpu.matmul %0, %1, %cst {dimension_numbers = #tpu.dot_dimension_numbers<[1], [0], [0], [1], [0, 0, 1, 1], [], []>} : vector<8x640xbf16>, vector<640x128xbf16>, vector<8x128xf32> -> vector<8x128xf32>
    %c0_3 = arith.constant 0 : index
    %c0_4 = arith.constant 0 : index
    %3 = vector.load %arg3[%c0_3, %c0_4] : memref<1x128xf32, #tpu.memory_space<vmem>>, vector<1x128xf32>
    %4 = vector.broadcast %3 : vector<1x128xf32> to vector<8x128xf32>
    %5 = arith.addf %2, %4 : vector<8x128xf32>
    %cst_5 = arith.constant 0.000000e+00 : f32
    %6 = vector.broadcast %cst_5 : f32 to vector<8x128xf32>
    %7 = arith.maximumf %5, %6 : vector<8x128xf32>
    %8 = arith.truncf %7 : vector<8x128xf32> to vector<8x128xbf16>
    %c0_6 = arith.constant 0 : index
    %c0_7 = arith.constant 0 : index
    %9 = vector.load %arg4[%c0_6, %c0_7] : memref<8x128xbf16, #tpu.memory_space<vmem>>, vector<8x128xbf16>
    tpu.vector_store %arg4[%c0_6, %c0_7], %8 {strides = array<i32>} : memref<8x128xbf16, #tpu.memory_space<vmem>>, vector<8x128xbf16>,
    return
  }
  func.func @transform_0(%arg0: i32) -> (i32, i32) {
    %c0_i32 = arith.constant 0 : i32
    %c0_i32_0 = arith.constant 0 : i32
    return %arg0, %c0_i32 : i32, i32
  }
  func.func @transform_1(%arg0: i32) -> (i32, i32) {
    %c0_i32 = arith.constant 0 : i32
    %c0_i32_0 = arith.constant 0 : i32
    %c0_i32_1 = arith.constant 0 : i32
    return %c0_i32, %c0_i32_0 : i32, i32
  }
  func.func @transform_2(%arg0: i32) -> (i32, i32) {
    %c0_i32 = arith.constant 0 : i32
    %c0_i32_0 = arith.constant 0 : i32
    %c0_i32_1 = arith.constant 0 : i32
    return %c0_i32, %c0_i32_0 : i32, i32
  }
  func.func @transform_3(%arg0: i32) -> (i32, i32) {
    %c0_i32 = arith.constant 0 : i32
    %c0_i32_0 = arith.constant 0 : i32
    return %arg0, %c0_i32 : i32, i32
  }
}

module attributes {stable_mosaic.version = 11 : i64} {
  func.func @dueling_head_kernel(%arg0: i32, %arg1: memref<2x512xbf16, #tpu.memory_space<vmem>>, %arg2: memref<512x1024xbf16, #tpu.memory_space<vmem>>, %arg3: memref<1x1024xf32, #tpu.memory_space<vmem>>, %arg4: memref<1024x128xbf16, #tpu.memory_space<vmem>>, %arg5: memref<1x128xf32, #tpu.memory_space<vmem>>, %arg6: memref<2x128xf32, #tpu.memory_space<vmem>>) attributes {dimension_semantics = [#tpu.dimension_semantics<parallel>], iteration_bounds = array<i64: 1>, scalar_prefetch = 0 : i64, scratch_operands = 0 : i64, tpu.core_type = #tpu.core_type<tc>, window_params = [{transform_indices = @transform_0, window_bounds = array<i64: 2, 512>}, {pipeline_mode = #tpu.pipeline_mode<synchronous>, transform_indices = @transform_1, window_bounds = array<i64: 512, 1024>}, {pipeline_mode = #tpu.pipeline_mode<synchronous>, transform_indices = @transform_2, window_bounds = array<i64: 1, 1024>}, {pipeline_mode = #tpu.pipeline_mode<synchronous>, transform_indices = @transform_3, window_bounds = array<i64: 1024, 128>}, {pipeline_mode = #tpu.pipeline_mode<synchronous>, transform_indices = @transform_4, window_bounds = array<i64: 1, 128>}, {transform_indices = @transform_5, window_bounds = array<i64: 2, 128>}]} {
    %c0 = arith.constant 0 : index
    %c0_0 = arith.constant 0 : index
    %0 = vector.load %arg1[%c0, %c0_0] : memref<2x512xbf16, #tpu.memory_space<vmem>>, vector<2x512xbf16>
    %c0_1 = arith.constant 0 : index
    %c0_2 = arith.constant 0 : index
    %1 = vector.load %arg2[%c0_1, %c0_2] : memref<512x1024xbf16, #tpu.memory_space<vmem>>, vector<512x1024xbf16>
    %cst = arith.constant dense<0.000000e+00> : vector<2x1024xf32>
    %2 = tpu.matmul %0, %1, %cst {dimension_numbers = #tpu.dot_dimension_numbers<[1], [0], [0], [1], [0, 0, 1, 1], [], []>} : vector<2x512xbf16>, vector<512x1024xbf16>, vector<2x1024xf32> -> vector<2x1024xf32>
    %c0_3 = arith.constant 0 : index
    %c0_4 = arith.constant 0 : index
    %3 = vector.load %arg3[%c0_3, %c0_4] : memref<1x1024xf32, #tpu.memory_space<vmem>>, vector<1x1024xf32>
    %4 = vector.broadcast %3 : vector<1x1024xf32> to vector<2x1024xf32>
    %5 = arith.addf %2, %4 : vector<2x1024xf32>
    %cst_5 = arith.constant 0.000000e+00 : f32
    %6 = vector.broadcast %cst_5 : f32 to vector<2x1024xf32>
    %7 = arith.maximumf %5, %6 : vector<2x1024xf32>
    %8 = arith.truncf %7 : vector<2x1024xf32> to vector<2x1024xbf16>
    %c0_6 = arith.constant 0 : index
    %c0_7 = arith.constant 0 : index
    %9 = vector.load %arg4[%c0_6, %c0_7] : memref<1024x128xbf16, #tpu.memory_space<vmem>>, vector<1024x128xbf16>
    %cst_8 = arith.constant dense<0.000000e+00> : vector<2x128xf32>
    %10 = tpu.matmul %8, %9, %cst_8 {dimension_numbers = #tpu.dot_dimension_numbers<[1], [0], [0], [1], [0, 0, 1, 1], [], []>} : vector<2x1024xbf16>, vector<1024x128xbf16>, vector<2x128xf32> -> vector<2x128xf32>
    %c0_9 = arith.constant 0 : index
    %c0_10 = arith.constant 0 : index
    %11 = vector.load %arg5[%c0_9, %c0_10] : memref<1x128xf32, #tpu.memory_space<vmem>>, vector<1x128xf32>
    %12 = vector.broadcast %11 : vector<1x128xf32> to vector<2x128xf32>
    %13 = arith.addf %10, %12 : vector<2x128xf32>
    %c0_11 = arith.constant 0 : index
    %c0_12 = arith.constant 0 : index
    %14 = vector.load %arg6[%c0_11, %c0_12] : memref<2x128xf32, #tpu.memory_space<vmem>>, vector<2x128xf32>
    tpu.vector_store %arg6[%c0_11, %c0_12], %13 {strides = array<i32>} : memref<2x128xf32, #tpu.memory_space<vmem>>, vector<2x128xf32>,
    return
  }
  func.func @transform_0(%arg0: i32) -> (i32, i32) {
    %c0_i32 = arith.constant 0 : i32
    %c0_i32_0 = arith.constant 0 : i32
    return %arg0, %c0_i32 : i32, i32
  }
  func.func @transform_1(%arg0: i32) -> (i32, i32) {
    %c0_i32 = arith.constant 0 : i32
    %c0_i32_0 = arith.constant 0 : i32
    %c0_i32_1 = arith.constant 0 : i32
    return %c0_i32, %c0_i32_0 : i32, i32
  }
  func.func @transform_2(%arg0: i32) -> (i32, i32) {
    %c0_i32 = arith.constant 0 : i32
    %c0_i32_0 = arith.constant 0 : i32
    %c0_i32_1 = arith.constant 0 : i32
    return %c0_i32, %c0_i32_0 : i32, i32
  }
  func.func @transform_3(%arg0: i32) -> (i32, i32) {
    %c0_i32 = arith.constant 0 : i32
    %c0_i32_0 = arith.constant 0 : i32
    %c0_i32_1 = arith.constant 0 : i32
    return %c0_i32, %c0_i32_0 : i32, i32
  }
  func.func @transform_4(%arg0: i32) -> (i32, i32) {
    %c0_i32 = arith.constant 0 : i32
    %c0_i32_0 = arith.constant 0 : i32
    %c0_i32_1 = arith.constant 0 : i32
    return %c0_i32, %c0_i32_0 : i32, i32
  }
  func.func @transform_5(%arg0: i32) -> (i32, i32) {
    %c0_i32 = arith.constant 0 : i32
    %c0_i32_0 = arith.constant 0 : i32
    return %arg0, %c0_i32 : i32, i32
  }
}

</mosaic_0001>

<llo_original>
// kernel: dueling_dqn_forward.2
$region0: #{dueling_dqn_forward.2}
  #allocation0 [shape = 'u32[]', space=smem, size = 0x4, offset = 0x4, fixed_abs, tag = 'smem constant byte address 0x4 - core index']
  #allocation1 [shape = 'u32[72,128]{1,0:T(1,128)}', space=vmem, size = 0x9000, scoped, tag = 'internal scratch']
  %s0 = inlined_call_operand.vmem [shape: bf16[8,640], index: 0, kind: input, shape index: {}]
  %s1 = inlined_call_operand.vmem [shape: bf16[640,128], index: 1, kind: input, shape index: {}]
  %s2 = inlined_call_operand.vmem [shape: f32[1,128], index: 2, kind: input, shape index: {}]
  %s3 = inlined_call_operand.vmem [shape: bf16[8,128], index: 3, kind: output, shape index: {}]
  %s4 = sld [smem:[#allocation0]]
  $region22: #{dueling_dqn_forward.2} parent=0
    _
  %s6 = ssub.s32 1, %s4
  %s7 = scalar_select 0, %s6, %s4
  // Predicated region
  $region2: #{dueling_dqn_forward.2} parent=0 // pred_check
    _
  $region3: #{dueling_dqn_forward.2} parent=0 // pred_check_branch
    %9 = sbr.rel (0) target = $region5
  $region4: #{dueling_dqn_forward.2} parent=0 // pred_region
    _
  $region5: #{dueling_dqn_forward.2} parent=0 // pred_fallthru
    _
  // Predicated region
  $region6: #{dueling_dqn_forward.2} parent=0 // pred_check
    _
  $region7: #{dueling_dqn_forward.2} parent=0 // pred_check_branch
    %11 = sbr.rel (0) target = $region9
  $region8: #{dueling_dqn_forward.2} parent=0 // pred_region
    _
  $region9: #{dueling_dqn_forward.2} parent=0 // pred_fallthru
    _
  // Predicated region
  $region10: #{dueling_dqn_forward.2} parent=0 // pred_check
    _
  $region11: #{dueling_dqn_forward.2} parent=0 // pred_check_branch
    %13 = sbr.rel (0) target = $region13
  $region12: #{dueling_dqn_forward.2} parent=0 // pred_region
    _
  $region13: #{dueling_dqn_forward.2} parent=0 // pred_fallthru
    _
  %v14 = vld [vmem:[%s0] sm:$0xff]
  %v15 = vld [vmem:[%s0 + $0x8] sm:$0xff]
  %v16 = vld [vmem:[%s0 + $0x10] sm:$0xf]
  %v17 = vld [vmem:[%s1] sm:$0xf]
  %v18 = vld [vmem:[%s1 + $0x4] sm:$0xf]
  %v19 = vld [vmem:[%s1 + $0x8] sm:$0xf]
  %v20 = vld [vmem:[%s1 + $0xc] sm:$0xf]
  %v21 = vld [vmem:[%s1 + $0x10] sm:$0xf]
  %v22 = vld [vmem:[%s1 + $0x14] sm:$0xf]
  %v23 = vld [vmem:[%s1 + $0x18] sm:$0xf]
  %v24 = vld [vmem:[%s1 + $0x1c] sm:$0xf]
  %v25 = vld [vmem:[%s1 + $0x20] sm:$0xf]
  %v26 = vld [vmem:[%s1 + $0x24] sm:$0xf]
  %v27 = vld [vmem:[%s1 + $0x28] sm:$0xf]
  %v28 = vld [vmem:[%s1 + $0x2c] sm:$0xf]
  %v29 = vld [vmem:[%s1 + $0x30] sm:$0xf]
  %v30 = vld [vmem:[%s1 + $0x34] sm:$0xf]
  %v31 = vld [vmem:[%s1 + $0x38] sm:$0xf]
  %v32 = vld [vmem:[%s1 + $0x3c] sm:$0xf]
  %v33 = vld [vmem:[%s1 + $0x40] sm:$0xf]
  %v34 = vld [vmem:[%s1 + $0x44] sm:$0xf]
  %v35 = vld [vmem:[%s1 + $0x48] sm:$0xf]
  %v36 = vld [vmem:[%s1 + $0x4c] sm:$0xf]
  %v37 = vld [vmem:[%s1 + $0x50] sm:$0xf]
  %v38 = vld [vmem:[%s1 + $0x54] sm:$0xf]
  %v39 = vld [vmem:[%s1 + $0x58] sm:$0xf]
  %v40 = vld [vmem:[%s1 + $0x5c] sm:$0xf]
  %v41 = vld [vmem:[%s1 + $0x60] sm:$0xf]
  %v42 = vld [vmem:[%s1 + $0x64] sm:$0xf]
  %v43 = vld [vmem:[%s1 + $0x68] sm:$0xf]
  %v44 = vld [vmem:[%s1 + $0x6c] sm:$0xf]
  %v45 = vld [vmem:[%s1 + $0x70] sm:$0xf]
  %v46 = vld [vmem:[%s1 + $0x74] sm:$0xf]
  %v47 = vld [vmem:[%s1 + $0x78] sm:$0xf]
  %v48 = vld [vmem:[%s1 + $0x7c] sm:$0xf]
  %v49 = vld [vmem:[%s1 + $0x80] sm:$0xf]
  %v50 = vld [vmem:[%s1 + $0x84] sm:$0xf]
  %v51 = vld [vmem:[%s1 + $0x88] sm:$0xf]
  %v52 = vld [vmem:[%s1 + $0x8c] sm:$0xf]
  %v53 = vld [vmem:[%s1 + $0x90] sm:$0xf]
  %v54 = vld [vmem:[%s1 + $0x94] sm:$0xf]
  %v55 = vld [vmem:[%s1 + $0x98] sm:$0xf]
  %v56 = vld [vmem:[%s1 + $0x9c] sm:$0xf]
  %v57 = vld [vmem:[%s1 + $0xa0] sm:$0xf]
  %v58 = vld [vmem:[%s1 + $0xa4] sm:$0xf]
  %v59 = vld [vmem:[%s1 + $0xa8] sm:$0xf]
  %v60 = vld [vmem:[%s1 + $0xac] sm:$0xf]
  %v61 = vld [vmem:[%s1 + $0xb0] sm:$0xf]
  %v62 = vld [vmem:[%s1 + $0xb4] sm:$0xf]
  %v63 = vld [vmem:[%s1 + $0xb8] sm:$0xf]
  %v64 = vld [vmem:[%s1 + $0xbc] sm:$0xf]
  %v65 = vld [vmem:[%s1 + $0xc0] sm:$0xf]
  %v66 = vld [vmem:[%s1 + $0xc4] sm:$0xf]
  %v67 = vld [vmem:[%s1 + $0xc8] sm:$0xf]
  %v68 = vld [vmem:[%s1 + $0xcc] sm:$0xf]
  %v69 = vld [vmem:[%s1 + $0xd0] sm:$0xf]
  %v70 = vld [vmem:[%s1 + $0xd4] sm:$0xf]
  %v71 = vld [vmem:[%s1 + $0xd8] sm:$0xf]
  %v72 = vld [vmem:[%s1 + $0xdc] sm:$0xf]
  %v73 = vld [vmem:[%s1 + $0xe0] sm:$0xf]
  %v74 = vld [vmem:[%s1 + $0xe4] sm:$0xf]
  %v75 = vld [vmem:[%s1 + $0xe8] sm:$0xf]
  %v76 = vld [vmem:[%s1 + $0xec] sm:$0xf]
  %v77 = vld [vmem:[%s1 + $0xf0] sm:$0xf]
  %v78 = vld [vmem:[%s1 + $0xf4] sm:$0xf]
  %v79 = vld [vmem:[%s1 + $0xf8] sm:$0xf]
  %v80 = vld [vmem:[%s1 + $0xfc] sm:$0xf]
  %v81 = vld [vmem:[%s1 + $0x100] sm:$0xf]
  %v82 = vld [vmem:[%s1 + $0x104] sm:$0xf]
  %v83 = vld [vmem:[%s1 + $0x108] sm:$0xf]
  %v84 = vld [vmem:[%s1 + $0x10c] sm:$0xf]
  %v85 = vld [vmem:[%s1 + $0x110] sm:$0xf]
  %v86 = vld [vmem:[%s1 + $0x114] sm:$0xf]
  %v87 = vld [vmem:[%s1 + $0x118] sm:$0xf]
  %v88 = vld [vmem:[%s1 + $0x11c] sm:$0xf]
  %v89 = vld [vmem:[%s1 + $0x120] sm:$0xf]
  %v90 = vld [vmem:[%s1 + $0x124] sm:$0xf]
  %v91 = vld [vmem:[%s1 + $0x128] sm:$0xf]
  %v92 = vld [vmem:[%s1 + $0x12c] sm:$0xf]
  %v93 = vld [vmem:[%s1 + $0x130] sm:$0xf]
  %v94 = vld [vmem:[%s1 + $0x134] sm:$0xf]
  %v95 = vld [vmem:[%s1 + $0x138] sm:$0xf]
  %v96 = vld [vmem:[%s1 + $0x13c] sm:$0xf]
  %v97 = vld [vmem:[%s2] sm:$0x1]
  %v99 = vperm.slane %v97, 0
  %v104 = vunpack.c.l.b16 %v14
  %v105 = vunpack.c.h.b16 %v14
  %v106 = vunpack.c.l.b16 %v15
  %v107 = vunpack.c.h.b16 %v15
  %v108 = vunpack.c.l.b16 %v16
  %v109 = vpack.c.b16 %v104, %v104
  %v110 = vpack.c.b16 %v105, %v105
  %v111 = vpack.c.b16 %v106, %v106
  %v112 = vpack.c.b16 %v107, %v107
  %v113 = vpack.c.b16 %v108, %v108
  %v199 = vunpack.c.l.b16 %v17
  %v200 = vunpack.c.l.b16 %v18
  %v201 = vunpack.c.l.b16 %v19
  %v202 = vunpack.c.l.b16 %v20
  %v203 = vunpack.c.l.b16 %v21
  %v204 = vunpack.c.l.b16 %v22
  %v205 = vunpack.c.l.b16 %v23
  %v206 = vunpack.c.l.b16 %v24
  %v207 = vunpack.c.l.b16 %v25
  %v208 = vunpack.c.l.b16 %v26
  %v209 = vunpack.c.l.b16 %v27
  %v210 = vunpack.c.l.b16 %v28
  %v211 = vunpack.c.l.b16 %v29
  %v212 = vunpack.c.l.b16 %v30
  %v213 = vunpack.c.l.b16 %v31
  %v214 = vunpack.c.l.b16 %v32
  %v215 = vunpack.c.l.b16 %v33
  %v216 = vunpack.c.l.b16 %v34
  %v217 = vunpack.c.l.b16 %v35
  %v218 = vunpack.c.l.b16 %v36
  %v219 = vunpack.c.l.b16 %v37
  %v220 = vunpack.c.l.b16 %v38
  %v221 = vunpack.c.l.b16 %v39
  %v222 = vunpack.c.l.b16 %v40
  %v223 = vunpack.c.l.b16 %v41
  %v224 = vunpack.c.l.b16 %v42
  %v225 = vunpack.c.l.b16 %v43
  %v226 = vunpack.c.l.b16 %v44
  %v227 = vunpack.c.l.b16 %v45
  %v228 = vunpack.c.l.b16 %v46
  %v229 = vunpack.c.l.b16 %v47
  %v230 = vunpack.c.l.b16 %v48
  %v231 = vunpack.c.l.b16 %v49
  %v232 = vunpack.c.l.b16 %v50
  %v233 = vunpack.c.l.b16 %v51
  %v234 = vunpack.c.l.b16 %v52
  %v235 = vunpack.c.l.b16 %v53
  %v236 = vunpack.c.l.b16 %v54
  %v237 = vunpack.c.l.b16 %v55
  %v238 = vunpack.c.l.b16 %v56
  %v239 = vunpack.c.l.b16 %v57
  %v240 = vunpack.c.l.b16 %v58
  %v241 = vunpack.c.l.b16 %v59
  %v242 = vunpack.c.l.b16 %v60
  %v243 = vunpack.c.l.b16 %v61
  %v244 = vunpack.c.l.b16 %v62
  %v245 = vunpack.c.l.b16 %v63
  %v246 = vunpack.c.l.b16 %v64
  %v247 = vunpack.c.l.b16 %v65
  %v248 = vunpack.c.l.b16 %v66
  %v249 = vunpack.c.l.b16 %v67
  %v250 = vunpack.c.l.b16 %v68
  %v251 = vunpack.c.l.b16 %v69
  %v252 = vunpack.c.l.b16 %v70
  %v253 = vunpack.c.l.b16 %v71
  %v254 = vunpack.c.l.b16 %v72
  %v255 = vunpack.c.l.b16 %v73
  %v256 = vunpack.c.l.b16 %v74
  %v257 = vunpack.c.l.b16 %v75
  %v258 = vunpack.c.l.b16 %v76
  %v259 = vunpack.c.l.b16 %v77
  %v260 = vunpack.c.l.b16 %v78
  %v261 = vunpack.c.l.b16 %v79
  %v262 = vunpack.c.l.b16 %v80
  %v263 = vunpack.c.l.b16 %v81
  %v264 = vunpack.c.l.b16 %v82
  %v265 = vunpack.c.l.b16 %v83
  %v266 = vunpack.c.l.b16 %v84
  %v267 = vunpack.c.l.b16 %v85
  %v268 = vunpack.c.l.b16 %v86
  %v269 = vunpack.c.l.b16 %v87
  %v270 = vunpack.c.l.b16 %v88
  %v271 = vunpack.c.l.b16 %v89
  %v272 = vunpack.c.l.b16 %v90
  %v273 = vunpack.c.l.b16 %v91
  %v274 = vunpack.c.l.b16 %v92
  %v275 = vunpack.c.l.b16 %v93
  %v276 = vunpack.c.l.b16 %v94
  %v277 = vunpack.c.l.b16 %v95
  %v278 = vunpack.c.l.b16 %v96
  %v279 = vpack.c.b16 %v200, %v199
  %v280 = vpack.c.b16 %v202, %v201
  %v281 = vpack.c.b16 %v204, %v203
  %v282 = vpack.c.b16 %v206, %v205
  %v283 = vpack.c.b16 %v208, %v207
  %v284 = vpack.c.b16 %v210, %v209
  %v285 = vpack.c.b16 %v212, %v211
  %v286 = vpack.c.b16 %v214, %v213
  %v287 = vpack.c.b16 %v216, %v215
  %v288 = vpack.c.b16 %v218, %v217
  %v289 = vpack.c.b16 %v220, %v219
  %v290 = vpack.c.b16 %v222, %v221
  %v291 = vpack.c.b16 %v224, %v223
  %v292 = vpack.c.b16 %v226, %v225
  %v293 = vpack.c.b16 %v228, %v227
  %v294 = vpack.c.b16 %v230, %v229
  %v295 = vpack.c.b16 %v232, %v231
  %v296 = vpack.c.b16 %v234, %v233
  %v297 = vpack.c.b16 %v236, %v235
  %v298 = vpack.c.b16 %v238, %v237
  %v299 = vpack.c.b16 %v240, %v239
  %v300 = vpack.c.b16 %v242, %v241
  %v301 = vpack.c.b16 %v244, %v243
  %v302 = vpack.c.b16 %v246, %v245
  %v303 = vpack.c.b16 %v248, %v247
  %v304 = vpack.c.b16 %v250, %v249
  %v305 = vpack.c.b16 %v252, %v251
  %v306 = vpack.c.b16 %v254, %v253
  %v307 = vpack.c.b16 %v256, %v255
  %v308 = vpack.c.b16 %v258, %v257
  %v309 = vpack.c.b16 %v260, %v259
  %v310 = vpack.c.b16 %v262, %v261
  %v311 = vpack.c.b16 %v264, %v263
  %v312 = vpack.c.b16 %v266, %v265
  %v313 = vpack.c.b16 %v268, %v267
  %v314 = vpack.c.b16 %v270, %v269
  %v315 = vpack.c.b16 %v272, %v271
  %v316 = vpack.c.b16 %v274, %v273
  %v317 = vpack.c.b16 %v276, %v275
  %v318 = vpack.c.b16 %v278, %v277
  %359 = vmatpush.bf16.msra.mxu0 %v286
  %360 = vmatpush.bf16.msra.mxu0 %v285
  %361 = vmatpush.bf16.msra.mxu0 %v284
  %362 = vmatpush.bf16.msra.mxu0 %v283
  %363 = vmatpush.bf16.msra.mxu0 %v282
  %364 = vmatpush.bf16.msra.mxu0 %v281
  %365 = vmatpush.bf16.msra.mxu0 %v280
  %366 = vmatpush.bf16.msra.mxu0 %v279
  %367 = vmatmul.bf16.gmra.mxu0 %v109
  %v368 = vpop.f32.mrf.mxu0
  %v369 = vadd.f32 %v99, %v368
  %v370 = vpop.f32.mrf.mxu0
  %371 = vdwg.mxu0
  %372 = vmatpush.bf16.msra.mxu0 %v294
  %373 = vmatpush.bf16.msra.mxu0 %v293
  %374 = vmatpush.bf16.msra.mxu0 %v292
  %375 = vmatpush.bf16.msra.mxu0 %v291
  %376 = vmatpush.bf16.msra.mxu0 %v290
  %377 = vmatpush.bf16.msra.mxu0 %v289
  %378 = vmatpush.bf16.msra.mxu0 %v288
  %379 = vmatpush.bf16.msra.mxu0 %v287
  %380 = vmatmul.bf16.gmra.mxu0 %v110
  %v381 = vpop.f32.mrf.mxu0
  %v382 = vadd.f32 %v369, %v381
  %v383 = vpop.f32.mrf.mxu0
  %384 = vdwg.mxu0
  %385 = vmatpush.bf16.msra.mxu0 %v302
  %386 = vmatpush.bf16.msra.mxu0 %v301
  %387 = vmatpush.bf16.msra.mxu0 %v300
  %388 = vmatpush.bf16.msra.mxu0 %v299
  %389 = vmatpush.bf16.msra.mxu0 %v298
  %390 = vmatpush.bf16.msra.mxu0 %v297
  %391 = vmatpush.bf16.msra.mxu0 %v296
  %392 = vmatpush.bf16.msra.mxu0 %v295
  %393 = vmatmul.bf16.gmra.mxu0 %v111
  %v394 = vpop.f32.mrf.mxu0
  %v395 = vadd.f32 %v382, %v394
  %v396 = vpop.f32.mrf.mxu0
  %397 = vdwg.mxu0
  %398 = vmatpush.bf16.msra.mxu0 %v310
  %399 = vmatpush.bf16.msra.mxu0 %v309
  %400 = vmatpush.bf16.msra.mxu0 %v308
  %401 = vmatpush.bf16.msra.mxu0 %v307
  %402 = vmatpush.bf16.msra.mxu0 %v306
  %403 = vmatpush.bf16.msra.mxu0 %v305
  %404 = vmatpush.bf16.msra.mxu0 %v304
  %405 = vmatpush.bf16.msra.mxu0 %v303
  %406 = vmatmul.bf16.gmra.mxu0 %v112
  %v407 = vpop.f32.mrf.mxu0
  %v408 = vadd.f32 %v395, %v407
  %v409 = vpop.f32.mrf.mxu0
  %410 = vdwg.mxu0
  %411 = vmatpush.bf16.msra.mxu0 %v318
  %412 = vmatpush.bf16.msra.mxu0 %v317
  %413 = vmatpush.bf16.msra.mxu0 %v316
  %414 = vmatpush.bf16.msra.mxu0 %v315
  %415 = vmatpush.bf16.msra.mxu0 %v314
  %416 = vmatpush.bf16.msra.mxu0 %v313
  %417 = vmatpush.bf16.msra.mxu0 %v312
  %418 = vmatpush.bf16.msra.mxu0 %v311
  %419 = vmatmul.bf16.gmra.mxu0 %v113
  %v420 = vpop.f32.mrf.mxu0
  %v421 = vadd.f32 %v408, %v420
  %v422 = vpop.f32.mrf.mxu0
  %423 = vdwg.mxu0
  %v424 = vmax.f32 %v421, 0.0
  %v425 = vpack.c.bf16 %v424, %v424
  %426 = vst [vmem:[%s3] sm:$0xf] %v425
  // Predicated region
  $region14: #{dueling_dqn_forward.2} parent=0 // pred_check
    _
  $region15: #{dueling_dqn_forward.2} parent=0 // pred_check_branch
    %428 = sbr.rel (0) target = $region17
  $region16: #{dueling_dqn_forward.2} parent=0 // pred_region
    _
  $region17: #{dueling_dqn_forward.2} parent=0 // pred_fallthru
    _
  // Predicated region
  $region18: #{dueling_dqn_forward.2} parent=0 // pred_check
    _
  $region19: #{dueling_dqn_forward.2} parent=0 // pred_check_branch
    %430 = sbr.rel (0) target = $region21
  $region20: #{dueling_dqn_forward.2} parent=0 // pred_region
    _
  $region21: #{dueling_dqn_forward.2} parent=0 // pred_fallthru
    _

// kernel: dueling_dqn_forward.3
$region0: #{dueling_dqn_forward.3}
  #allocation0 [shape = 'u32[]', space=smem, size = 0x4, offset = 0x4, fixed_abs, tag = 'smem constant byte address 0x4 - core index']
  #allocation1 [shape = 'u32[72,128]{1,0:T(1,128)}', space=vmem, size = 0x9000, scoped, tag = 'internal scratch']
  %s0 = inlined_call_operand.vmem [shape: bf16[2,512], index: 0, kind: input, shape index: {}]
  %s1 = inlined_call_operand.vmem [shape: bf16[512,1024], index: 1, kind: input, shape index: {}]
  %s2 = inlined_call_operand.vmem [shape: f32[1,1024], index: 2, kind: input, shape index: {}]
  %s3 = inlined_call_operand.vmem [shape: bf16[1024,128], index: 3, kind: input, shape index: {}]
  %s4 = inlined_call_operand.vmem [shape: f32[1,128], index: 4, kind: input, shape index: {}]
  %s5 = inlined_call_operand.hbm [shape: f32[2,128], index: 5, kind: output, shape index: {}]
  %s6 = sld [smem:[#allocation0]]
  $region30: #{dueling_dqn_forward.3} parent=0
    _
  %s8 = ssub.s32 1, %s6
  %s9 = scalar_select 0, %s8, %s6
  $region1: #{dueling_dqn_forward.3} parent=0
    #allocation2 [shape = 'u8[1024]{0}', space=vmem, size = 0x400, scoped, tag = 'output window, operand 0, single buffered']
    #allocation3 [shape = 's32[1]{0}', space=sflag, size = 0x4, scoped, tag = 'scoped memory for dueling_dqn_forward.3']
    %10 = vsyncpa [#allocation3], 0
    // Predicated region
    $region2: #{dueling_dqn_forward.3} parent=1 // pred_check
      _
    $region3: #{dueling_dqn_forward.3} parent=1 // pred_check_branch
      %12 = sbr.rel (0) target = $region5
    $region4: #{dueling_dqn_forward.3} parent=1 // pred_region
      _
    $region5: #{dueling_dqn_forward.3} parent=1 // pred_fallthru
      _
    // Predicated region
    $region6: #{dueling_dqn_forward.3} parent=1 // pred_check
      _
    $region7: #{dueling_dqn_forward.3} parent=1 // pred_check_branch
      %14 = sbr.rel (0) target = $region9
    $region8: #{dueling_dqn_forward.3} parent=1 // pred_region
      _
    $region9: #{dueling_dqn_forward.3} parent=1 // pred_fallthru
      _
    // Predicated region
    $region10: #{dueling_dqn_forward.3} parent=1 // pred_check
      _
    $region11: #{dueling_dqn_forward.3} parent=1 // pred_check_branch
      %16 = sbr.rel (0) target = $region13
    $region12: #{dueling_dqn_forward.3} parent=1 // pred_region
      _
    $region13: #{dueling_dqn_forward.3} parent=1 // pred_fallthru
      _
    // Predicated region
    $region14: #{dueling_dqn_forward.3} parent=1 // pred_check
      _
    $region15: #{dueling_dqn_forward.3} parent=1 // pred_check_branch
      %18 = sbr.rel (0) target = $region17
    $region16: #{dueling_dqn_forward.3} parent=1 // pred_region
      _
    $region17: #{dueling_dqn_forward.3} parent=1 // pred_fallthru
      _
    // Predicated region
    $region18: #{dueling_dqn_forward.3} parent=1 // pred_check
      _
    $region19: #{dueling_dqn_forward.3} parent=1 // pred_check_branch
      %20 = sbr.rel (0) target = $region21
    $region20: #{dueling_dqn_forward.3} parent=1 // pred_region
      _
    $region21: #{dueling_dqn_forward.3} parent=1 // pred_fallthru
      _
    %v21 = vld [vmem:[%s0] sm:$0xf]
    %v22 = vld [vmem:[%s1] sm:$0xff]
    %v23 = vld [vmem:[%s1 + $0x8] sm:$0xff]
    %v24 = vld [vmem:[%s1 + $0x10] sm:$0xff]
    %v25 = vld [vmem:[%s1 + $0x18] sm:$0xff]
    %v26 = vld [vmem:[%s1 + $0x20] sm:$0xff]
    %v27 = vld [vmem:[%s1 + $0x28] sm:$0xff]
    %v28 = vld [vmem:[%s1 + $0x30] sm:$0xff]
    %v29 = vld [vmem:[%s1 + $0x38] sm:$0xff]
    %v30 = vld [vmem:[%s1 + $0x40] sm:$0xff]
    %v31 = vld [vmem:[%s1 + $0x48] sm:$0xff]
    %v32 = vld [vmem:[%s1 + $0x50] sm:$0xff]
    %v33 = vld [vmem:[%s1 + $0x58] sm:$0xff]
    %v34 = vld [vmem:[%s1 + $0x60] sm:$0xff]
    %v35 = vld [vmem:[%s1 + $0x68] sm:$0xff]
    %v36 = vld [vmem:[%s1 + $0x70] sm:$0xff]
    %v37 = vld [vmem:[%s1 + $0x78] sm:$0xff]
    %v38 = vld [vmem:[%s1 + $0x80] sm:$0xff]
    %v39 = vld [vmem:[%s1 + $0x88] sm:$0xff]
    %v40 = vld [vmem:[%s1 + $0x90] sm:$0xff]
    %v41 = vld [vmem:[%s1 + $0x98] sm:$0xff]
    %v42 = vld [vmem:[%s1 + $0xa0] sm:$0xff]
    %v43 = vld [vmem:[%s1 + $0xa8] sm:$0xff]
    %v44 = vld [vmem:[%s1 + $0xb0] sm:$0xff]
    %v45 = vld [vmem:[%s1 + $0xb8] sm:$0xff]
    %v46 = vld [vmem:[%s1 + $0xc0] sm:$0xff]
    %v47 = vld [vmem:[%s1 + $0xc8] sm:$0xff]
    %v48 = vld [vmem:[%s1 + $0xd0] sm:$0xff]
    %v49 = vld [vmem:[%s1 + $0xd8] sm:$0xff]
    %v50 = vld [vmem:[%s1 + $0xe0] sm:$0xff]
    %v51 = vld [vmem:[%s1 + $0xe8] sm:$0xff]
    %v52 = vld [vmem:[%s1 + $0xf0] sm:$0xff]
    %v53 = vld [vmem:[%s1 + $0xf8] sm:$0xff]
    %v54 = vld [vmem:[%s1 + $0x100] sm:$0xff]
    %v55 = vld [vmem:[%s1 + $0x108] sm:$0xff]
    %v56 = vld [vmem:[%s1 + $0x110] sm:$0xff]
    %v57 = vld [vmem:[%s1 + $0x118] sm:$0xff]
    %v58 = vld [vmem:[%s1 + $0x120] sm:$0xff]
    %v59 = vld [vmem:[%s1 + $0x128] sm:$0xff]
    %v60 = vld [vmem:[%s1 + $0x130] sm:$0xff]
    %v61 = vld [vmem:[%s1 + $0x138] sm:$0xff]
    %v62 = vld [vmem:[%s1 + $0x140] sm:$0xff]
    %v63 = vld [vmem:[%s1 + $0x148] sm:$0xff]
    %v64 = vld [vmem:[%s1 + $0x150] sm:$0xff]
    %v65 = vld [vmem:[%s1 + $0x158] sm:$0xff]
    %v66 = vld [vmem:[%s1 + $0x160] sm:$0xff]
    %v67 = vld [vmem:[%s1 + $0x168] sm:$0xff]
    %v68 = vld [vmem:[%s1 + $0x170] sm:$0xff]
    %v69 = vld [vmem:[%s1 + $0x178] sm:$0xff]
    %v70 = vld [vmem:[%s1 + $0x180] sm:$0xff]
    %v71 = vld [vmem:[%s1 + $0x188] sm:$0xff]
    %v72 = vld [vmem:[%s1 + $0x190] sm:$0xff]
    %v73 = vld [vmem:[%s1 + $0x198] sm:$0xff]
    %v74 = vld [vmem:[%s1 + $0x1a0] sm:$0xff]
    %v75 = vld [vmem:[%s1 + $0x1a8] sm:$0xff]
    %v76 = vld [vmem:[%s1 + $0x1b0] sm:$0xff]
    %v77 = vld [vmem:[%s1 + $0x1b8] sm:$0xff]
    %v78 = vld [vmem:[%s1 + $0x1c0] sm:$0xff]
    %v79 = vld [vmem:[%s1 + $0x1c8] sm:$0xff]
    %v80 = vld [vmem:[%s1 + $0x1d0] sm:$0xff]
    %v81 = vld [vmem:[%s1 + $0x1d8] sm:$0xff]
    %v82 = vld [vmem:[%s1 + $0x1e0] sm:$0xff]
    %v83 = vld [vmem:[%s1 + $0x1e8] sm:$0xff]
    %v84 = vld [vmem:[%s1 + $0x1f0] sm:$0xff]
    %v85 = vld [vmem:[%s1 + $0x1f8] sm:$0xff]
    %v86 = vld [vmem:[%s1 + $0x200] sm:$0xff]
    %v87 = vld [vmem:[%s1 + $0x208] sm:$0xff]
    %v88 = vld [vmem:[%s1 + $0x210] sm:$0xff]
    %v89 = vld [vmem:[%s1 + $0x218] sm:$0xff]
    %v90 = vld [vmem:[%s1 + $0x220] sm:$0xff]
    %v91 = vld [vmem:[%s1 + $0x228] sm:$0xff]
    %v92 = vld [vmem:[%s1 + $0x230] sm:$0xff]
    %v93 = vld [vmem:[%s1 + $0x238] sm:$0xff]
    %v94 = vld [vmem:[%s1 + $0x240] sm:$0xff]
    %v95 = vld [vmem:[%s1 + $0x248] sm:$0xff]
    %v96 = vld [vmem:[%s1 + $0x250] sm:$0xff]
    %v97 = vld [vmem:[%s1 + $0x258] sm:$0xff]
    %v98 = vld [vmem:[%s1 + $0x260] sm:$0xff]
    %v99 = vld [vmem:[%s1 + $0x268] sm:$0xff]
    %v100 = vld [vmem:[%s1 + $0x270] sm:$0xff]
    %v101 = vld [vmem:[%s1 + $0x278] sm:$0xff]
    %v102 = vld [vmem:[%s1 + $0x280] sm:$0xff]
    %v103 = vld [vmem:[%s1 + $0x288] sm:$0xff]
    %v104 = vld [vmem:[%s1 + $0x290] sm:$0xff]
    %v105 = vld [vmem:[%s1 + $0x298] sm:$0xff]
    %v106 = vld [vmem:[%s1 + $0x2a0] sm:$0xff]
    %v107 = vld [vmem:[%s1 + $0x2a8] sm:$0xff]
    %v108 = vld [vmem:[%s1 + $0x2b0] sm:$0xff]
    %v109 = vld [vmem:[%s1 + $0x2b8] sm:$0xff]
    %v110 = vld [vmem:[%s1 + $0x2c0] sm:$0xff]
    %v111 = vld [vmem:[%s1 + $0x2c8] sm:$0xff]
    %v112 = vld [vmem:[%s1 + $0x2d0] sm:$0xff]
    %v113 = vld [vmem:[%s1 + $0x2d8] sm:$0xff]
    %v114 = vld [vmem:[%s1 + $0x2e0] sm:$0xff]
    %v115 = vld [vmem:[%s1 + $0x2e8] sm:$0xff]
    %v116 = vld [vmem:[%s1 + $0x2f0] sm:$0xff]
    %v117 = vld [vmem:[%s1 + $0x2f8] sm:$0xff]
    %v118 = vld [vmem:[%s1 + $0x300] sm:$0xff]
    %v119 = vld [vmem:[%s1 + $0x308] sm:$0xff]
    %v120 = vld [vmem:[%s1 + $0x310] sm:$0xff]
    %v121 = vld [vmem:[%s1 + $0x318] sm:$0xff]
    %v122 = vld [vmem:[%s1 + $0x320] sm:$0xff]
    %v123 = vld [vmem:[%s1 + $0x328] sm:$0xff]
    %v124 = vld [vmem:[%s1 + $0x330] sm:$0xff]
    %v125 = vld [vmem:[%s1 + $0x338] sm:$0xff]
    %v126 = vld [vmem:[%s1 + $0x340] sm:$0xff]
    %v127 = vld [vmem:[%s1 + $0x348] sm:$0xff]
    %v128 = vld [vmem:[%s1 + $0x350] sm:$0xff]
    %v129 = vld [vmem:[%s1 + $0x358] sm:$0xff]
    %v130 = vld [vmem:[%s1 + $0x360] sm:$0xff]
    %v131 = vld [vmem:[%s1 + $0x368] sm:$0xff]
    %v132 = vld [vmem:[%s1 + $0x370] sm:$0xff]
    %v133 = vld [vmem:[%s1 + $0x378] sm:$0xff]
    %v134 = vld [vmem:[%s1 + $0x380] sm:$0xff]
    %v135 = vld [vmem:[%s1 + $0x388] sm:$0xff]
    %v136 = vld [vmem:[%s1 + $0x390] sm:$0xff]
    %v137 = vld [vmem:[%s1 + $0x398] sm:$0xff]
    %v138 = vld [vmem:[%s1 + $0x3a0] sm:$0xff]
    %v139 = vld [vmem:[%s1 + $0x3a8] sm:$0xff]
    %v140 = vld [vmem:[%s1 + $0x3b0] sm:$0xff]
    %v141 = vld [vmem:[%s1 + $0x3b8] sm:$0xff]
    %v142 = vld [vmem:[%s1 + $0x3c0] sm:$0xff]
    %v143 = vld [vmem:[%s1 + $0x3c8] sm:$0xff]
    %v144 = vld [vmem:[%s1 + $0x3d0] sm:$0xff]
    %v145 = vld [vmem:[%s1 + $0x3d8] sm:$0xff]
    %v146 = vld [vmem:[%s1 + $0x3e0] sm:$0xff]
    %v147 = vld [vmem:[%s1 + $0x3e8] sm:$0xff]
    %v148 = vld [vmem:[%s1 + $0x3f0] sm:$0xff]
    %v149 = vld [vmem:[%s1 + $0x3f8] sm:$0xff]
    %v150 = vld [vmem:[%s1 + $0x400] sm:$0xff]
    %v151 = vld [vmem:[%s1 + $0x408] sm:$0xff]
    %v152 = vld [vmem:[%s1 + $0x410] sm:$0xff]
    %v153 = vld [vmem:[%s1 + $0x418] sm:$0xff]
    %v154 = vld [vmem:[%s1 + $0x420] sm:$0xff]
    %v155 = vld [vmem:[%s1 + $0x428] sm:$0xff]
    %v156 = vld [vmem:[%s1 + $0x430] sm:$0xff]
    %v157 = vld [vmem:[%s1 + $0x438] sm:$0xff]
    %v158 = vld [vmem:[%s1 + $0x440] sm:$0xff]
    %v159 = vld [vmem:[%s1 + $0x448] sm:$0xff]
    %v160 = vld [vmem:[%s1 + $0x450] sm:$0xff]
    %v161 = vld [vmem:[%s1 + $0x458] sm:$0xff]
    %v162 = vld [vmem:[%s1 + $0x460] sm:$0xff]
    %v163 = vld [vmem:[%s1 + $0x468] sm:$0xff]
    %v164 = vld [vmem:[%s1 + $0x470] sm:$0xff]
    %v165 = vld [vmem:[%s1 + $0x478] sm:$0xff]
    %v166 = vld [vmem:[%s1 + $0x480] sm:$0xff]
    %v167 = vld [vmem:[%s1 + $0x488] sm:$0xff]
    %v168 = vld [vmem:[%s1 + $0x490] sm:$0xff]
    %v169 = vld [vmem:[%s1 + $0x498] sm:$0xff]
    %v170 = vld [vmem:[%s1 + $0x4a0] sm:$0xff]
    %v171 = vld [vmem:[%s1 + $0x4a8] sm:$0xff]
    %v172 = vld [vmem:[%s1 + $0x4b0] sm:$0xff]
    %v173 = vld [vmem:[%s1 + $0x4b8] sm:$0xff]
    %v174 = vld [vmem:[%s1 + $0x4c0] sm:$0xff]
    %v175 = vld [vmem:[%s1 + $0x4c8] sm:$0xff]
    %v176 = vld [vmem:[%s1 + $0x4d0] sm:$0xff]
    %v177 = vld [vmem:[%s1 + $0x4d8] sm:$0xff]
    %v178 = vld [vmem:[%s1 + $0x4e0] sm:$0xff]
    %v179 = vld [vmem:[%s1 + $0x4e8] sm:$0xff]
    %v180 = vld [vmem:[%s1 + $0x4f0] sm:$0xff]
    %v181 = vld [vmem:[%s1 + $0x4f8] sm:$0xff]
    %v182 = vld [vmem:[%s1 + $0x500] sm:$0xff]
    %v183 = vld [vmem:[%s1 + $0x508] sm:$0xff]
    %v184 = vld [vmem:[%s1 + $0x510] sm:$0xff]
    %v185 = vld [vmem:[%s1 + $0x518] sm:$0xff]
    %v186 = vld [vmem:[%s1 + $0x520] sm:$0xff]
    %v187 = vld [vmem:[%s1 + $0x528] sm:$0xff]
    %v188 = vld [vmem:[%s1 + $0x530] sm:$0xff]
    %v189 = vld [vmem:[%s1 + $0x538] sm:$0xff]
    %v190 = vld [vmem:[%s1 + $0x540] sm:$0xff]
    %v191 = vld [vmem:[%s1 + $0x548] sm:$0xff]
    %v192 = vld [vmem:[%s1 + $0x550] sm:$0xff]
    %v193 = vld [vmem:[%s1 + $0x558] sm:$0xff]
    %v194 = vld [vmem:[%s1 + $0x560] sm:$0xff]
    %v195 = vld [vmem:[%s1 + $0x568] sm:$0xff]
    %v196 = vld [vmem:[%s1 + $0x570] sm:$0xff]
    %v197 = vld [vmem:[%s1 + $0x578] sm:$0xff]
    %v198 = vld [vmem:[%s1 + $0x580] sm:$0xff]
    %v199 = vld [vmem:[%s1 + $0x588] sm:$0xff]
    %v200 = vld [vmem:[%s1 + $0x590] sm:$0xff]
    %v201 = vld [vmem:[%s1 + $0x598] sm:$0xff]
    %v202 = vld [vmem:[%s1 + $0x5a0] sm:$0xff]
    %v203 = vld [vmem:[%s1 + $0x5a8] sm:$0xff]
    %v204 = vld [vmem:[%s1 + $0x5b0] sm:$0xff]
    %v205 = vld [vmem:[%s1 + $0x5b8] sm:$0xff]
    %v206 = vld [vmem:[%s1 + $0x5c0] sm:$0xff]
    %v207 = vld [vmem:[%s1 + $0x5c8] sm:$0xff]
    %v208 = vld [vmem:[%s1 + $0x5d0] sm:$0xff]
    %v209 = vld [vmem:[%s1 + $0x5d8] sm:$0xff]
    %v210 = vld [vmem:[%s1 + $0x5e0] sm:$0xff]
    %v211 = vld [vmem:[%s1 + $0x5e8] sm:$0xff]
    %v212 = vld [vmem:[%s1 + $0x5f0] sm:$0xff]
    %v213 = vld [vmem:[%s1 + $0x5f8] sm:$0xff]
    %v214 = vld [vmem:[%s1 + $0x600] sm:$0xff]
    %v215 = vld [vmem:[%s1 + $0x608] sm:$0xff]
    %v216 = vld [vmem:[%s1 + $0x610] sm:$0xff]
    %v217 = vld [vmem:[%s1 + $0x618] sm:$0xff]
    %v218 = vld [vmem:[%s1 + $0x620] sm:$0xff]
    %v219 = vld [vmem:[%s1 + $0x628] sm:$0xff]
    %v220 = vld [vmem:[%s1 + $0x630] sm:$0xff]
    %v221 = vld [vmem:[%s1 + $0x638] sm:$0xff]
    %v222 = vld [vmem:[%s1 + $0x640] sm:$0xff]
    %v223 = vld [vmem:[%s1 + $0x648] sm:$0xff]
    %v224 = vld [vmem:[%s1 + $0x650] sm:$0xff]
    %v225 = vld [vmem:[%s1 + $0x658] sm:$0xff]
    %v226 = vld [vmem:[%s1 + $0x660] sm:$0xff]
    %v227 = vld [vmem:[%s1 + $0x668] sm:$0xff]
    %v228 = vld [vmem:[%s1 + $0x670] sm:$0xff]
    %v229 = vld [vmem:[%s1 + $0x678] sm:$0xff]
    %v230 = vld [vmem:[%s1 + $0x680] sm:$0xff]
    %v231 = vld [vmem:[%s1 + $0x688] sm:$0xff]
    %v232 = vld [vmem:[%s1 + $0x690] sm:$0xff]
    %v233 = vld [vmem:[%s1 + $0x698] sm:$0xff]
    %v234 = vld [vmem:[%s1 + $0x6a0] sm:$0xff]
    %v235 = vld [vmem:[%s1 + $0x6a8] sm:$0xff]
    %v236 = vld [vmem:[%s1 + $0x6b0] sm:$0xff]
    %v237 = vld [vmem:[%s1 + $0x6b8] sm:$0xff]
    %v238 = vld [vmem:[%s1 + $0x6c0] sm:$0xff]
    %v239 = vld [vmem:[%s1 + $0x6c8] sm:$0xff]
    %v240 = vld [vmem:[%s1 + $0x6d0] sm:$0xff]
    %v241 = vld [vmem:[%s1 + $0x6d8] sm:$0xff]
    %v242 = vld [vmem:[%s1 + $0x6e0] sm:$0xff]
    %v243 = vld [vmem:[%s1 + $0x6e8] sm:$0xff]
    %v244 = vld [vmem:[%s1 + $0x6f0] sm:$0xff]
    %v245 = vld [vmem:[%s1 + $0x6f8] sm:$0xff]
    %v246 = vld [vmem:[%s1 + $0x700] sm:$0xff]
    %v247 = vld [vmem:[%s1 + $0x708] sm:$0xff]
    %v248 = vld [vmem:[%s1 + $0x710] sm:$0xff]
    %v249 = vld [vmem:[%s1 + $0x718] sm:$0xff]
    %v250 = vld [vmem:[%s1 + $0x720] sm:$0xff]
    %v251 = vld [vmem:[%s1 + $0x728] sm:$0xff]
    %v252 = vld [vmem:[%s1 + $0x730] sm:$0xff]
    %v253 = vld [vmem:[%s1 + $0x738] sm:$0xff]
    %v254 = vld [vmem:[%s1 + $0x740] sm:$0xff]
    %v255 = vld [vmem:[%s1 + $0x748] sm:$0xff]
    %v256 = vld [vmem:[%s1 + $0x750] sm:$0xff]
    %v257 = vld [vmem:[%s1 + $0x758] sm:$0xff]
    %v258 = vld [vmem:[%s1 + $0x760] sm:$0xff]
    %v259 = vld [vmem:[%s1 + $0x768] sm:$0xff]
    %v260 = vld [vmem:[%s1 + $0x770] sm:$0xff]
    %v261 = vld [vmem:[%s1 + $0x778] sm:$0xff]
    %v262 = vld [vmem:[%s1 + $0x780] sm:$0xff]
    %v263 = vld [vmem:[%s1 + $0x788] sm:$0xff]
    %v264 = vld [vmem:[%s1 + $0x790] sm:$0xff]
    %v265 = vld [vmem:[%s1 + $0x798] sm:$0xff]
    %v266 = vld [vmem:[%s1 + $0x7a0] sm:$0xff]
    %v267 = vld [vmem:[%s1 + $0x7a8] sm:$0xff]
    %v268 = vld [vmem:[%s1 + $0x7b0] sm:$0xff]
    %v269 = vld [vmem:[%s1 + $0x7b8] sm:$0xff]
    %v270 = vld [vmem:[%s1 + $0x7c0] sm:$0xff]
    %v271 = vld [vmem:[%s1 + $0x7c8] sm:$0xff]
    %v272 = vld [vmem:[%s1 + $0x7d0] sm:$0xff]
    %v273 = vld [vmem:[%s1 + $0x7d8] sm:$0xff]
    %v274 = vld [vmem:[%s1 + $0x7e0] sm:$0xff]
    %v275 = vld [vmem:[%s1 + $0x7e8] sm:$0xff]
    %v276 = vld [vmem:[%s1 + $0x7f0] sm:$0xff]
    %v277 = vld [vmem:[%s1 + $0x7f8] sm:$0xff]
    %v278 = vld [vmem:[%s2] sm:$0xff]
    %v280 = vperm.slane %v278, 0
    %v281 = vperm.slane %v278, 1
    %v282 = vperm.slane %v278, 2
    %v283 = vperm.slane %v278, 3
    %v284 = vperm.slane %v278, 4
    %v285 = vperm.slane %v278, 5
    %v286 = vperm.slane %v278, 6
    %v287 = vperm.slane %v278, 7
    %297 = vst [vmem:[#allocation1] ss:$9 sm:$0xff] %v21
    %v298 = vld [vmem:[#allocation1] sm:$0xff]
    %v299 = vld [vmem:[#allocation1 + $0x9] sm:$0xff]
    %v300 = vld [vmem:[#allocation1 + $0x12] sm:$0xff]
    %v301 = vld [vmem:[#allocation1 + $0x1b] sm:$0xff]
    %v562 = vunpack.c.l.b16 %v22
    %v563 = vunpack.c.h.b16 %v22
    %v564 = vunpack.c.l.b16 %v23
    %v565 = vunpack.c.h.b16 %v23
    %v566 = vunpack.c.l.b16 %v24
    %v567 = vunpack.c.h.b16 %v24
    %v568 = vunpack.c.l.b16 %v25
    %v569 = vunpack.c.h.b16 %v25
    %v570 = vunpack.c.l.b16 %v26
    %v571 = vunpack.c.h.b16 %v26
    %v572 = vunpack.c.l.b16 %v27
    %v573 = vunpack.c.h.b16 %v27
    %v574 = vunpack.c.l.b16 %v28
    %v575 = vunpack.c.h.b16 %v28
    %v576 = vunpack.c.l.b16 %v29
    %v577 = vunpack.c.h.b16 %v29
    %v578 = vunpack.c.l.b16 %v30
    %v579 = vunpack.c.h.b16 %v30
    %v580 = vunpack.c.l.b16 %v31
    %v581 = vunpack.c.h.b16 %v31
    %v582 = vunpack.c.l.b16 %v32
    %v583 = vunpack.c.h.b16 %v32
    %v584 = vunpack.c.l.b16 %v33
    %v585 = vunpack.c.h.b16 %v33
    %v586 = vunpack.c.l.b16 %v34
    %v587 = vunpack.c.h.b16 %v34
    %v588 = vunpack.c.l.b16 %v35
    %v589 = vunpack.c.h.b16 %v35
    %v590 = vunpack.c.l.b16 %v36
    %v591 = vunpack.c.h.b16 %v36
    %v592 = vunpack.c.l.b16 %v37
    %v593 = vunpack.c.h.b16 %v37
    %v594 = vunpack.c.l.b16 %v38
    %v595 = vunpack.c.h.b16 %v38
    %v596 = vunpack.c.l.b16 %v39
    %v597 = vunpack.c.h.b16 %v39
    %v598 = vunpack.c.l.b16 %v40
    %v599 = vunpack.c.h.b16 %v40
    %v600 = vunpack.c.l.b16 %v41
    %v601 = vunpack.c.h.b16 %v41
    %v602 = vunpack.c.l.b16 %v42
    %v603 = vunpack.c.h.b16 %v42
    %v604 = vunpack.c.l.b16 %v43
    %v605 = vunpack.c.h.b16 %v43
    %v606 = vunpack.c.l.b16 %v44
    %v607 = vunpack.c.h.b16 %v44
    %v608 = vunpack.c.l.b16 %v45
    %v609 = vunpack.c.h.b16 %v45
    %v610 = vunpack.c.l.b16 %v46
    %v611 = vunpack.c.h.b16 %v46
    %v612 = vunpack.c.l.b16 %v47
    %v613 = vunpack.c.h.b16 %v47
    %v614 = vunpack.c.l.b16 %v48
    %v615 = vunpack.c.h.b16 %v48
    %v616 = vunpack.c.l.b16 %v49
    %v617 = vunpack.c.h.b16 %v49
    %v618 = vunpack.c.l.b16 %v50
    %v619 = vunpack.c.h.b16 %v50
    %v620 = vunpack.c.l.b16 %v51
    %v621 = vunpack.c.h.b16 %v51
    %v622 = vunpack.c.l.b16 %v52
    %v623 = vunpack.c.h.b16 %v52
    %v624 = vunpack.c.l.b16 %v53
    %v625 = vunpack.c.h.b16 %v53
    %v626 = vunpack.c.l.b16 %v54
    %v627 = vunpack.c.h.b16 %v54
    %v628 = vunpack.c.l.b16 %v55
    %v629 = vunpack.c.h.b16 %v55
    %v630 = vunpack.c.l.b16 %v56
    %v631 = vunpack.c.h.b16 %v56
    %v632 = vunpack.c.l.b16 %v57
    %v633 = vunpack.c.h.b16 %v57
    %v634 = vunpack.c.l.b16 %v58
    %v635 = vunpack.c.h.b16 %v58
    %v636 = vunpack.c.l.b16 %v59
    %v637 = vunpack.c.h.b16 %v59
    %v638 = vunpack.c.l.b16 %v60
    %v639 = vunpack.c.h.b16 %v60
    %v640 = vunpack.c.l.b16 %v61
    %v641 = vunpack.c.h.b16 %v61
    %v642 = vunpack.c.l.b16 %v62
    %v643 = vunpack.c.h.b16 %v62
    %v644 = vunpack.c.l.b16 %v63
    %v645 = vunpack.c.h.b16 %v63
    %v646 = vunpack.c.l.b16 %v64
    %v647 = vunpack.c.h.b16 %v64
    %v648 = vunpack.c.l.b16 %v65
    %v649 = vunpack.c.h.b16 %v65
    %v650 = vunpack.c.l.b16 %v66
    %v651 = vunpack.c.h.b16 %v66
    %v652 = vunpack.c.l.b16 %v67
    %v653 = vunpack.c.h.b16 %v67
    %v654 = vunpack.c.l.b16 %v68
    %v655 = vunpack.c.h.b16 %v68
    %v656 = vunpack.c.l.b16 %v69
    %v657 = vunpack.c.h.b16 %v69
    %v658 = vunpack.c.l.b16 %v70
    %v659 = vunpack.c.h.b16 %v70
    %v660 = vunpack.c.l.b16 %v71
    %v661 = vunpack.c.h.b16 %v71
    %v662 = vunpack.c.l.b16 %v72
    %v663 = vunpack.c.h.b16 %v72
    %v664 = vunpack.c.l.b16 %v73
    %v665 = vunpack.c.h.b16 %v73
    %v666 = vunpack.c.l.b16 %v74
    %v667 = vunpack.c.h.b16 %v74
    %v668 = vunpack.c.l.b16 %v75
    %v669 = vunpack.c.h.b16 %v75
    %v670 = vunpack.c.l.b16 %v76
    %v671 = vunpack.c.h.b16 %v76
    %v672 = vunpack.c.l.b16 %v77
    %v673 = vunpack.c.h.b16 %v77
    %v674 = vunpack.c.l.b16 %v78
    %v675 = vunpack.c.h.b16 %v78
    %v676 = vunpack.c.l.b16 %v79
    %v677 = vunpack.c.h.b16 %v79
    %v678 = vunpack.c.l.b16 %v80
    %v679 = vunpack.c.h.b16 %v80
    %v680 = vunpack.c.l.b16 %v81
    %v681 = vunpack.c.h.b16 %v81
    %v682 = vunpack.c.l.b16 %v82
    %v683 = vunpack.c.h.b16 %v82
    %v684 = vunpack.c.l.b16 %v83
    %v685 = vunpack.c.h.b16 %v83
    %v686 = vunpack.c.l.b16 %v84
    %v687 = vunpack.c.h.b16 %v84
    %v688 = vunpack.c.l.b16 %v85
    %v689 = vunpack.c.h.b16 %v85
    %v690 = vunpack.c.l.b16 %v86
    %v691 = vunpack.c.h.b16 %v86
    %v692 = vunpack.c.l.b16 %v87
    %v693 = vunpack.c.h.b16 %v87
    %v694 = vunpack.c.l.b16 %v88
    %v695 = vunpack.c.h.b16 %v88
    %v696 = vunpack.c.l.b16 %v89
    %v697 = vunpack.c.h.b16 %v89
    %v698 = vunpack.c.l.b16 %v90
    %v699 = vunpack.c.h.b16 %v90
    %v700 = vunpack.c.l.b16 %v91
    %v701 = vunpack.c.h.b16 %v91
    %v702 = vunpack.c.l.b16 %v92
    %v703 = vunpack.c.h.b16 %v92
    %v704 = vunpack.c.l.b16 %v93
    %v705 = vunpack.c.h.b16 %v93
    %v706 = vunpack.c.l.b16 %v94
    %v707 = vunpack.c.h.b16 %v94
    %v708 = vunpack.c.l.b16 %v95
    %v709 = vunpack.c.h.b16 %v95
    %v710 = vunpack.c.l.b16 %v96
    %v711 = vunpack.c.h.b16 %v96
    %v712 = vunpack.c.l.b16 %v97
    %v713 = vunpack.c.h.b16 %v97
    %v714 = vunpack.c.l.b16 %v98
    %v715 = vunpack.c.h.b16 %v98
    %v716 = vunpack.c.l.b16 %v99
    %v717 = vunpack.c.h.b16 %v99
    %v718 = vunpack.c.l.b16 %v100
    %v719 = vunpack.c.h.b16 %v100
    %v720 = vunpack.c.l.b16 %v101
    %v721 = vunpack.c.h.b16 %v101
    %v722 = vunpack.c.l.b16 %v102
    %v723 = vunpack.c.h.b16 %v102
    %v724 = vunpack.c.l.b16 %v103
    %v725 = vunpack.c.h.b16 %v103
    %v726 = vunpack.c.l.b16 %v104
    %v727 = vunpack.c.h.b16 %v104
    %v728 = vunpack.c.l.b16 %v105
    %v729 = vunpack.c.h.b16 %v105
    %v730 = vunpack.c.l.b16 %v106
    %v731 = vunpack.c.h.b16 %v106
    %v732 = vunpack.c.l.b16 %v107
    %v733 = vunpack.c.h.b16 %v107
    %v734 = vunpack.c.l.b16 %v108
    %v735 = vunpack.c.h.b16 %v108
    %v736 = vunpack.c.l.b16 %v109
    %v737 = vunpack.c.h.b16 %v109
    %v738 = vunpack.c.l.b16 %v110
    %v739 = vunpack.c.h.b16 %v110
    %v740 = vunpack.c.l.b16 %v111
    %v741 = vunpack.c.h.b16 %v111
    %v742 = vunpack.c.l.b16 %v112
    %v743 = vunpack.c.h.b16 %v112
    %v744 = vunpack.c.l.b16 %v113
    %v745 = vunpack.c.h.b16 %v113
    %v746 = vunpack.c.l.b16 %v114
    %v747 = vunpack.c.h.b16 %v114
    %v748 = vunpack.c.l.b16 %v115
    %v749 = vunpack.c.h.b16 %v115
    %v750 = vunpack.c.l.b16 %v116
    %v751 = vunpack.c.h.b16 %v116
    %v752 = vunpack.c.l.b16 %v117
    %v753 = vunpack.c.h.b16 %v117
    %v754 = vunpack.c.l.b16 %v118
    %v755 = vunpack.c.h.b16 %v118
    %v756 = vunpack.c.l.b16 %v119
    %v757 = vunpack.c.h.b16 %v119
    %v758 = vunpack.c.l.b16 %v120
    %v759 = vunpack.c.h.b16 %v120
    %v760 = vunpack.c.l.b16 %v121
    %v761 = vunpack.c.h.b16 %v121
    %v762 = vunpack.c.l.b16 %v122
    %v763 = vunpack.c.h.b16 %v122
    %v764 = vunpack.c.l.b16 %v123
    %v765 = vunpack.c.h.b16 %v123
    %v766 = vunpack.c.l.b16 %v124
    %v767 = vunpack.c.h.b16 %v124
    %v768 = vunpack.c.l.b16 %v125
    %v769 = vunpack.c.h.b16 %v125
    %v770 = vunpack.c.l.b16 %v126
    %v771 = vunpack.c.h.b16 %v126
    %v772 = vunpack.c.l.b16 %v127
    %v773 = vunpack.c.h.b16 %v127
    %v774 = vunpack.c.l.b16 %v128
    %v775 = vunpack.c.h.b16 %v128
    %v776 = vunpack.c.l.b16 %v129
    %v777 = vunpack.c.h.b16 %v129
    %v778 = vunpack.c.l.b16 %v130
    %v779 = vunpack.c.h.b16 %v130
    %v780 = vunpack.c.l.b16 %v131
    %v781 = vunpack.c.h.b16 %v131
    %v782 = vunpack.c.l.b16 %v132
    %v783 = vunpack.c.h.b16 %v132
    %v784 = vunpack.c.l.b16 %v133
    %v785 = vunpack.c.h.b16 %v133
    %v786 = vunpack.c.l.b16 %v134
    %v787 = vunpack.c.h.b16 %v134
    %v788 = vunpack.c.l.b16 %v135
    %v789 = vunpack.c.h.b16 %v135
    %v790 = vunpack.c.l.b16 %v136
    %v791 = vunpack.c.h.b16 %v136
    %v792 = vunpack.c.l.b16 %v137
    %v793 = vunpack.c.h.b16 %v137
    %v794 = vunpack.c.l.b16 %v138
    %v795 = vunpack.c.h.b16 %v138
    %v796 = vunpack.c.l.b16 %v139
    %v797 = vunpack.c.h.b16 %v139
    %v798 = vunpack.c.l.b16 %v140
    %v799 = vunpack.c.h.b16 %v140
    %v800 = vunpack.c.l.b16 %v141
    %v801 = vunpack.c.h.b16 %v141
    %v802 = vunpack.c.l.b16 %v142
    %v803 = vunpack.c.h.b16 %v142
    %v804 = vunpack.c.l.b16 %v143
    %v805 = vunpack.c.h.b16 %v143
    %v806 = vunpack.c.l.b16 %v144
    %v807 = vunpack.c.h.b16 %v144
    %v808 = vunpack.c.l.b16 %v145
    %v809 = vunpack.c.h.b16 %v145
    %v810 = vunpack.c.l.b16 %v146
    %v811 = vunpack.c.h.b16 %v146
    %v812 = vunpack.c.l.b16 %v147
    %v813 = vunpack.c.h.b16 %v147
    %v814 = vunpack.c.l.b16 %v148
    %v815 = vunpack.c.h.b16 %v148
    %v816 = vunpack.c.l.b16 %v149
    %v817 = vunpack.c.h.b16 %v149
    %v818 = vunpack.c.l.b16 %v150
    %v819 = vunpack.c.h.b16 %v150
    %v820 = vunpack.c.l.b16 %v151
    %v821 = vunpack.c.h.b16 %v151
    %v822 = vunpack.c.l.b16 %v152
    %v823 = vunpack.c.h.b16 %v152
    %v824 = vunpack.c.l.b16 %v153
    %v825 = vunpack.c.h.b16 %v153
    %v826 = vunpack.c.l.b16 %v154
    %v827 = vunpack.c.h.b16 %v154
    %v828 = vunpack.c.l.b16 %v155
    %v829 = vunpack.c.h.b16 %v155
    %v830 = vunpack.c.l.b16 %v156
    %v831 = vunpack.c.h.b16 %v156
    %v832 = vunpack.c.l.b16 %v157
    %v833 = vunpack.c.h.b16 %v157
    %v834 = vunpack.c.l.b16 %v158
    %v835 = vunpack.c.h.b16 %v158
    %v836 = vunpack.c.l.b16 %v159
    %v837 = vunpack.c.h.b16 %v159
    %v838 = vunpack.c.l.b16 %v160
    %v839 = vunpack.c.h.b16 %v160
    %v840 = vunpack.c.l.b16 %v161
    %v841 = vunpack.c.h.b16 %v161
    %v842 = vunpack.c.l.b16 %v162
    %v843 = vunpack.c.h.b16 %v162
    %v844 = vunpack.c.l.b16 %v163
    %v845 = vunpack.c.h.b16 %v163
    %v846 = vunpack.c.l.b16 %v164
    %v847 = vunpack.c.h.b16 %v164
    %v848 = vunpack.c.l.b16 %v165
    %v849 = vunpack.c.h.b16 %v165
    %v850 = vunpack.c.l.b16 %v166
    %v851 = vunpack.c.h.b16 %v166
    %v852 = vunpack.c.l.b16 %v167
    %v853 = vunpack.c.h.b16 %v167
    %v854 = vunpack.c.l.b16 %v168
    %v855 = vunpack.c.h.b16 %v168
    %v856 = vunpack.c.l.b16 %v169
    %v857 = vunpack.c.h.b16 %v169
    %v858 = vunpack.c.l.b16 %v170
    %v859 = vunpack.c.h.b16 %v170
    %v860 = vunpack.c.l.b16 %v171
    %v861 = vunpack.c.h.b16 %v171
    %v862 = vunpack.c.l.b16 %v172
    %v863 = vunpack.c.h.b16 %v172
    %v864 = vunpack.c.l.b16 %v173
    %v865 = vunpack.c.h.b16 %v173
    %v866 = vunpack.c.l.b16 %v174
    %v867 = vunpack.c.h.b16 %v174
    %v868 = vunpack.c.l.b16 %v175
    %v869 = vunpack.c.h.b16 %v175
    %v870 = vunpack.c.l.b16 %v176
    %v871 = vunpack.c.h.b16 %v176
    %v872 = vunpack.c.l.b16 %v177
    %v873 = vunpack.c.h.b16 %v177
    %v874 = vunpack.c.l.b16 %v178
    %v875 = vunpack.c.h.b16 %v178
    %v876 = vunpack.c.l.b16 %v179
    %v877 = vunpack.c.h.b16 %v179
    %v878 = vunpack.c.l.b16 %v180
    %v879 = vunpack.c.h.b16 %v180
    %v880 = vunpack.c.l.b16 %v181
    %v881 = vunpack.c.h.b16 %v181
    %v882 = vunpack.c.l.b16 %v182
    %v883 = vunpack.c.h.b16 %v182
    %v884 = vunpack.c.l.b16 %v183
    %v885 = vunpack.c.h.b16 %v183
    %v886 = vunpack.c.l.b16 %v184
    %v887 = vunpack.c.h.b16 %v184
    %v888 = vunpack.c.l.b16 %v185
    %v889 = vunpack.c.h.b16 %v185
    %v890 = vunpack.c.l.b16 %v186
    %v891 = vunpack.c.h.b16 %v186
    %v892 = vunpack.c.l.b16 %v187
    %v893 = vunpack.c.h.b16 %v187
    %v894 = vunpack.c.l.b16 %v188
    %v895 = vunpack.c.h.b16 %v188
    %v896 = vunpack.c.l.b16 %v189
    %v897 = vunpack.c.h.b16 %v189
    %v898 = vunpack.c.l.b16 %v190
    %v899 = vunpack.c.h.b16 %v190
    %v900 = vunpack.c.l.b16 %v191
    %v901 = vunpack.c.h.b16 %v191
    %v902 = vunpack.c.l.b16 %v192
    %v903 = vunpack.c.h.b16 %v192
    %v904 = vunpack.c.l.b16 %v193
    %v905 = vunpack.c.h.b16 %v193
    %v906 = vunpack.c.l.b16 %v194
    %v907 = vunpack.c.h.b16 %v194
    %v908 = vunpack.c.l.b16 %v195
    %v909 = vunpack.c.h.b16 %v195
    %v910 = vunpack.c.l.b16 %v196
    %v911 = vunpack.c.h.b16 %v196
    %v912 = vunpack.c.l.b16 %v197
    %v913 = vunpack.c.h.b16 %v197
    %v914 = vunpack.c.l.b16 %v198
    %v915 = vunpack.c.h.b16 %v198
    %v916 = vunpack.c.l.b16 %v199
    %v917 = vunpack.c.h.b16 %v199
    %v918 = vunpack.c.l.b16 %v200
    %v919 = vunpack.c.h.b16 %v200
    %v920 = vunpack.c.l.b16 %v201
    %v921 = vunpack.c.h.b16 %v201
    %v922 = vunpack.c.l.b16 %v202
    %v923 = vunpack.c.h.b16 %v202
    %v924 = vunpack.c.l.b16 %v203
    %v925 = vunpack.c.h.b16 %v203
    %v926 = vunpack.c.l.b16 %v204
    %v927 = vunpack.c.h.b16 %v204
    %v928 = vunpack.c.l.b16 %v205
    %v929 = vunpack.c.h.b16 %v205
    %v930 = vunpack.c.l.b16 %v206
    %v931 = vunpack.c.h.b16 %v206
    %v932 = vunpack.c.l.b16 %v207
    %v933 = vunpack.c.h.b16 %v207
    %v934 = vunpack.c.l.b16 %v208
    %v935 = vunpack.c.h.b16 %v208
    %v936 = vunpack.c.l.b16 %v209
    %v937 = vunpack.c.h.b16 %v209
    %v938 = vunpack.c.l.b16 %v210
    %v939 = vunpack.c.h.b16 %v210
    %v940 = vunpack.c.l.b16 %v211
    %v941 = vunpack.c.h.b16 %v211
    %v942 = vunpack.c.l.b16 %v212
    %v943 = vunpack.c.h.b16 %v212
    %v944 = vunpack.c.l.b16 %v213
    %v945 = vunpack.c.h.b16 %v213
    %v946 = vunpack.c.l.b16 %v214
    %v947 = vunpack.c.h.b16 %v214
    %v948 = vunpack.c.l.b16 %v215
    %v949 = vunpack.c.h.b16 %v215
    %v950 = vunpack.c.l.b16 %v216
    %v951 = vunpack.c.h.b16 %v216
    %v952 = vunpack.c.l.b16 %v217
    %v953 = vunpack.c.h.b16 %v217
    %v954 = vunpack.c.l.b16 %v218
    %v955 = vunpack.c.h.b16 %v218
    %v956 = vunpack.c.l.b16 %v219
    %v957 = vunpack.c.h.b16 %v219
    %v958 = vunpack.c.l.b16 %v220
    %v959 = vunpack.c.h.b16 %v220
    %v960 = vunpack.c.l.b16 %v221
    %v961 = vunpack.c.h.b16 %v221
    %v962 = vunpack.c.l.b16 %v222
    %v963 = vunpack.c.h.b16 %v222
    %v964 = vunpack.c.l.b16 %v223
    %v965 = vunpack.c.h.b16 %v223
    %v966 = vunpack.c.l.b16 %v224
    %v967 = vunpack.c.h.b16 %v224
    %v968 = vunpack.c.l.b16 %v225
    %v969 = vunpack.c.h.b16 %v225
    %v970 = vunpack.c.l.b16 %v226
    %v971 = vunpack.c.h.b16 %v226
    %v972 = vunpack.c.l.b16 %v227
    %v973 = vunpack.c.h.b16 %v227
    %v974 = vunpack.c.l.b16 %v228
    %v975 = vunpack.c.h.b16 %v228
    %v976 = vunpack.c.l.b16 %v229
    %v977 = vunpack.c.h.b16 %v229
    %v978 = vunpack.c.l.b16 %v230
    %v979 = vunpack.c.h.b16 %v230
    %v980 = vunpack.c.l.b16 %v231
    %v981 = vunpack.c.h.b16 %v231
    %v982 = vunpack.c.l.b16 %v232
    %v983 = vunpack.c.h.b16 %v232
    %v984 = vunpack.c.l.b16 %v233
    %v985 = vunpack.c.h.b16 %v233
    %v986 = vunpack.c.l.b16 %v234
    %v987 = vunpack.c.h.b16 %v234
    %v988 = vunpack.c.l.b16 %v235
    %v989 = vunpack.c.h.b16 %v235
    %v990 = vunpack.c.l.b16 %v236
    %v991 = vunpack.c.h.b16 %v236
    %v992 = vunpack.c.l.b16 %v237
    %v993 = vunpack.c.h.b16 %v237
    %v994 = vunpack.c.l.b16 %v238
    %v995 = vunpack.c.h.b16 %v238
    %v996 = vunpack.c.l.b16 %v239
    %v997 = vunpack.c.h.b16 %v239
    %v998 = vunpack.c.l.b16 %v240
    %v999 = vunpack.c.h.b16 %v240
    %v1000 = vunpack.c.l.b16 %v241
    %v1001 = vunpack.c.h.b16 %v241
    %v1002 = vunpack.c.l.b16 %v242
    %v1003 = vunpack.c.h.b16 %v242
    %v1004 = vunpack.c.l.b16 %v243
    %v1005 = vunpack.c.h.b16 %v243
    %v1006 = vunpack.c.l.b16 %v244
    %v1007 = vunpack.c.h.b16 %v244
    %v1008 = vunpack.c.l.b16 %v245
    %v1009 = vunpack.c.h.b16 %v245
    %v1010 = vunpack.c.l.b16 %v246
    %v1011 = vunpack.c.h.b16 %v246
    %v1012 = vunpack.c.l.b16 %v247
    %v1013 = vunpack.c.h.b16 %v247
    %v1014 = vunpack.c.l.b16 %v248
    %v1015 = vunpack.c.h.b16 %v248
    %v1016 = vunpack.c.l.b16 %v249
    %v1017 = vunpack.c.h.b16 %v249
    %v1018 = vunpack.c.l.b16 %v250
    %v1019 = vunpack.c.h.b16 %v250
    %v1020 = vunpack.c.l.b16 %v251
    %v1021 = vunpack.c.h.b16 %v251
    %v1022 = vunpack.c.l.b16 %v252
    %v1023 = vunpack.c.h.b16 %v252
    %v1024 = vunpack.c.l.b16 %v253
    %v1025 = vunpack.c.h.b16 %v253
    %v1026 = vunpack.c.l.b16 %v254
    %v1027 = vunpack.c.h.b16 %v254
    %v1028 = vunpack.c.l.b16 %v255
    %v1029 = vunpack.c.h.b16 %v255
    %v1030 = vunpack.c.l.b16 %v256
    %v1031 = vunpack.c.h.b16 %v256
    %v1032 = vunpack.c.l.b16 %v257
    %v1033 = vunpack.c.h.b16 %v257
    %v1034 = vunpack.c.l.b16 %v258
    %v1035 = vunpack.c.h.b16 %v258
    %v1036 = vunpack.c.l.b16 %v259
    %v1037 = vunpack.c.h.b16 %v259
    %v1038 = vunpack.c.l.b16 %v260
    %v1039 = vunpack.c.h.b16 %v260
    %v1040 = vunpack.c.l.b16 %v261
    %v1041 = vunpack.c.h.b16 %v261
    %v1042 = vunpack.c.l.b16 %v262
    %v1043 = vunpack.c.h.b16 %v262
    %v1044 = vunpack.c.l.b16 %v263
    %v1045 = vunpack.c.h.b16 %v263
    %v1046 = vunpack.c.l.b16 %v264
    %v1047 = vunpack.c.h.b16 %v264
    %v1048 = vunpack.c.l.b16 %v265
    %v1049 = vunpack.c.h.b16 %v265
    %v1050 = vunpack.c.l.b16 %v266
    %v1051 = vunpack.c.h.b16 %v266
    %v1052 = vunpack.c.l.b16 %v267
    %v1053 = vunpack.c.h.b16 %v267
    %v1054 = vunpack.c.l.b16 %v268
    %v1055 = vunpack.c.h.b16 %v268
    %v1056 = vunpack.c.l.b16 %v269
    %v1057 = vunpack.c.h.b16 %v269
    %v1058 = vunpack.c.l.b16 %v270
    %v1059 = vunpack.c.h.b16 %v270
    %v1060 = vunpack.c.l.b16 %v271
    %v1061 = vunpack.c.h.b16 %v271
    %v1062 = vunpack.c.l.b16 %v272
    %v1063 = vunpack.c.h.b16 %v272
    %v1064 = vunpack.c.l.b16 %v273
    %v1065 = vunpack.c.h.b16 %v273
    %v1066 = vunpack.c.l.b16 %v274
    %v1067 = vunpack.c.h.b16 %v274
    %v1068 = vunpack.c.l.b16 %v275
    %v1069 = vunpack.c.h.b16 %v275
    %v1070 = vunpack.c.l.b16 %v276
    %v1071 = vunpack.c.h.b16 %v276
    %v1072 = vunpack.c.l.b16 %v277
    %v1073 = vunpack.c.h.b16 %v277
    %v1074 = vpack.c.b16 %v570, %v562
    %v1075 = vpack.c.b16 %v571, %v563
    %v1076 = vpack.c.b16 %v572, %v564
    %v1077 = vpack.c.b16 %v573, %v565
    %v1078 = vpack.c.b16 %v574, %v566
    %v1079 = vpack.c.b16 %v575, %v567
    %v1080 = vpack.c.b16 %v576, %v568
    %v1081 = vpack.c.b16 %v577, %v569
    %v1082 = vpack.c.b16 %v586, %v578
    %v1083 = vpack.c.b16 %v587, %v579
    %v1084 = vpack.c.b16 %v588, %v580
    %v1085 = vpack.c.b16 %v589, %v581
    %v1086 = vpack.c.b16 %v590, %v582
    %v1087 = vpack.c.b16 %v591, %v583
    %v1088 = vpack.c.b16 %v592, %v584
    %v1089 = vpack.c.b16 %v593, %v585
    %v1090 = vpack.c.b16 %v602, %v594
    %v1091 = vpack.c.b16 %v603, %v595
    %v1092 = vpack.c.b16 %v604, %v596
    %v1093 = vpack.c.b16 %v605, %v597
    %v1094 = vpack.c.b16 %v606, %v598
    %v1095 = vpack.c.b16 %v607, %v599
    %v1096 = vpack.c.b16 %v608, %v600
    %v1097 = vpack.c.b16 %v609, %v601
    %v1098 = vpack.c.b16 %v618, %v610
    %v1099 = vpack.c.b16 %v619, %v611
    %v1100 = vpack.c.b16 %v620, %v612
    %v1101 = vpack.c.b16 %v621, %v613
    %v1102 = vpack.c.b16 %v622, %v614
    %v1103 = vpack.c.b16 %v623, %v615
    %v1104 = vpack.c.b16 %v624, %v616
    %v1105 = vpack.c.b16 %v625, %v617
    %v1106 = vpack.c.b16 %v634, %v626
    %v1107 = vpack.c.b16 %v635, %v627
    %v1108 = vpack.c.b16 %v636, %v628
    %v1109 = vpack.c.b16 %v637, %v629
    %v1110 = vpack.c.b16 %v638, %v630
    %v1111 = vpack.c.b16 %v639, %v631
    %v1112 = vpack.c.b16 %v640, %v632
    %v1113 = vpack.c.b16 %v641, %v633
    %v1114 = vpack.c.b16 %v650, %v642
    %v1115 = vpack.c.b16 %v651, %v643
    %v1116 = vpack.c.b16 %v652, %v644
    %v1117 = vpack.c.b16 %v653, %v645
    %v1118 = vpack.c.b16 %v654, %v646
    %v1119 = vpack.c.b16 %v655, %v647
    %v1120 = vpack.c.b16 %v656, %v648
    %v1121 = vpack.c.b16 %v657, %v649
    %v1122 = vpack.c.b16 %v666, %v658
    %v1123 = vpack.c.b16 %v667, %v659
    %v1124 = vpack.c.b16 %v668, %v660
    %v1125 = vpack.c.b16 %v669, %v661
    %v1126 = vpack.c.b16 %v670, %v662
    %v1127 = vpack.c.b16 %v671, %v663
    %v1128 = vpack.c.b16 %v672, %v664
    %v1129 = vpack.c.b16 %v673, %v665
    %v1130 = vpack.c.b16 %v682, %v674
    %v1131 = vpack.c.b16 %v683, %v675
    %v1132 = vpack.c.b16 %v684, %v676
    %v1133 = vpack.c.b16 %v685, %v677
    %v1134 = vpack.c.b16 %v686, %v678
    %v1135 = vpack.c.b16 %v687, %v679
    %v1136 = vpack.c.b16 %v688, %v680
    %v1137 = vpack.c.b16 %v689, %v681
    %v1138 = vpack.c.b16 %v698, %v690
    %v1139 = vpack.c.b16 %v699, %v691
    %v1140 = vpack.c.b16 %v700, %v692
    %v1141 = vpack.c.b16 %v701, %v693
    %v1142 = vpack.c.b16 %v702, %v694
    %v1143 = vpack.c.b16 %v703, %v695
    %v1144 = vpack.c.b16 %v704, %v696
    %v1145 = vpack.c.b16 %v705, %v697
    %v1146 = vpack.c.b16 %v714, %v706
    %v1147 = vpack.c.b16 %v715, %v707
    %v1148 = vpack.c.b16 %v716, %v708
    %v1149 = vpack.c.b16 %v717, %v709
    %v1150 = vpack.c.b16 %v718, %v710
    %v1151 = vpack.c.b16 %v719, %v711
    %v1152 = vpack.c.b16 %v720, %v712
    %v1153 = vpack.c.b16 %v721, %v713
    %v1154 = vpack.c.b16 %v730, %v722
    %v1155 = vpack.c.b16 %v731, %v723
    %v1156 = vpack.c.b16 %v732, %v724
    %v1157 = vpack.c.b16 %v733, %v725
    %v1158 = vpack.c.b16 %v734, %v726
    %v1159 = vpack.c.b16 %v735, %v727
    %v1160 = vpack.c.b16 %v736, %v728
    %v1161 = vpack.c.b16 %v737, %v729
    %v1162 = vpack.c.b16 %v746, %v738
    %v1163 = vpack.c.b16 %v747, %v739
    %v1164 = vpack.c.b16 %v748, %v740
    %v1165 = vpack.c.b16 %v749, %v741
    %v1166 = vpack.c.b16 %v750, %v742
    %v1167 = vpack.c.b16 %v751, %v743
    %v1168 = vpack.c.b16 %v752, %v744
    %v1169 = vpack.c.b16 %v753, %v745
    %v1170 = vpack.c.b16 %v762, %v754
    %v1171 = vpack.c.b16 %v763, %v755
    %v1172 = vpack.c.b16 %v764, %v756
    %v1173 = vpack.c.b16 %v765, %v757
    %v1174 = vpack.c.b16 %v766, %v758
    %v1175 = vpack.c.b16 %v767, %v759
    %v1176 = vpack.c.b16 %v768, %v760
    %v1177 = vpack.c.b16 %v769, %v761
    %v1178 = vpack.c.b16 %v778, %v770
    %v1179 = vpack.c.b16 %v779, %v771
    %v1180 = vpack.c.b16 %v780, %v772
    %v1181 = vpack.c.b16 %v781, %v773
    %v1182 = vpack.c.b16 %v782, %v774
    %v1183 = vpack.c.b16 %v783, %v775
    %v1184 = vpack.c.b16 %v784, %v776
    %v1185 = vpack.c.b16 %v785, %v777
    %v1186 = vpack.c.b16 %v794, %v786
    %v1187 = vpack.c.b16 %v795, %v787
    %v1188 = vpack.c.b16 %v796, %v788
    %v1189 = vpack.c.b16 %v797, %v789
    %v1190 = vpack.c.b16 %v798, %v790
    %v1191 = vpack.c.b16 %v799, %v791
    %v1192 = vpack.c.b16 %v800, %v792
    %v1193 = vpack.c.b16 %v801, %v793
    %v1194 = vpack.c.b16 %v810, %v802
    %v1195 = vpack.c.b16 %v811, %v803
    %v1196 = vpack.c.b16 %v812, %v804
    %v1197 = vpack.c.b16 %v813, %v805
    %v1198 = vpack.c.b16 %v814, %v806
    %v1199 = vpack.c.b16 %v815, %v807
    %v1200 = vpack.c.b16 %v816, %v808
    %v1201 = vpack.c.b16 %v817, %v809
    %v1202 = vpack.c.b16 %v826, %v818
    %v1203 = vpack.c.b16 %v827, %v819
    %v1204 = vpack.c.b16 %v828, %v820
    %v1205 = vpack.c.b16 %v829, %v821
    %v1206 = vpack.c.b16 %v830, %v822
    %v1207 = vpack.c.b16 %v831, %v823
    %v1208 = vpack.c.b16 %v832, %v824
    %v1209 = vpack.c.b16 %v833, %v825
    %v1210 = vpack.c.b16 %v842, %v834
    %v1211 = vpack.c.b16 %v843, %v835
    %v1212 = vpack.c.b16 %v844, %v836
    %v1213 = vpack.c.b16 %v845, %v837
    %v1214 = vpack.c.b16 %v846, %v838
    %v1215 = vpack.c.b16 %v847, %v839
    %v1216 = vpack.c.b16 %v848, %v840
    %v1217 = vpack.c.b16 %v849, %v841
    %v1218 = vpack.c.b16 %v858, %v850
    %v1219 = vpack.c.b16 %v859, %v851
    %v1220 = vpack.c.b16 %v860, %v852
    %v1221 = vpack.c.b16 %v861, %v853
    %v1222 = vpack.c.b16 %v862, %v854
    %v1223 = vpack.c.b16 %v863, %v855
    %v1224 = vpack.c.b16 %v864, %v856
    %v1225 = vpack.c.b16 %v865, %v857
    %v1226 = vpack.c.b16 %v874, %v866
    %v1227 = vpack.c.b16 %v875, %v867
    %v1228 = vpack.c.b16 %v876, %v868
    %v1229 = vpack.c.b16 %v877, %v869
    %v1230 = vpack.c.b16 %v878, %v870
    %v1231 = vpack.c.b16 %v879, %v871
    %v1232 = vpack.c.b16 %v880, %v872
    %v1233 = vpack.c.b16 %v881, %v873
    %v1234 = vpack.c.b16 %v890, %v882
    %v1235 = vpack.c.b16 %v891, %v883
    %v1236 = vpack.c.b16 %v892, %v884
    %v1237 = vpack.c.b16 %v893, %v885
    %v1238 = vpack.c.b16 %v894, %v886
    %v1239 = vpack.c.b16 %v895, %v887
    %v1240 = vpack.c.b16 %v896, %v888
    %v1241 = vpack.c.b16 %v897, %v889
    %v1242 = vpack.c.b16 %v906, %v898
    %v1243 = vpack.c.b16 %v907, %v899
    %v1244 = vpack.c.b16 %v908, %v900
    %v1245 = vpack.c.b16 %v909, %v901
    %v1246 = vpack.c.b16 %v910, %v902
    %v1247 = vpack.c.b16 %v911, %v903
    %v1248 = vpack.c.b16 %v912, %v904
    %v1249 = vpack.c.b16 %v913, %v905
    %v1250 = vpack.c.b16 %v922, %v914
    %v1251 = vpack.c.b16 %v923, %v915
    %v1252 = vpack.c.b16 %v924, %v916
    %v1253 = vpack.c.b16 %v925, %v917
    %v1254 = vpack.c.b16 %v926, %v918
    %v1255 = vpack.c.b16 %v927, %v919
    %v1256 = vpack.c.b16 %v928, %v920
    %v1257 = vpack.c.b16 %v929, %v921
    %v1258 = vpack.c.b16 %v938, %v930
    %v1259 = vpack.c.b16 %v939, %v931
    %v1260 = vpack.c.b16 %v940, %v932
    %v1261 = vpack.c.b16 %v941, %v933
    %v1262 = vpack.c.b16 %v942, %v934
    %v1263 = vpack.c.b16 %v943, %v935
    %v1264 = vpack.c.b16 %v944, %v936
    %v1265 = vpack.c.b16 %v945, %v937
    %v1266 = vpack.c.b16 %v954, %v946
    %v1267 = vpack.c.b16 %v955, %v947
    %v1268 = vpack.c.b16 %v956, %v948
    %v1269 = vpack.c.b16 %v957, %v949
    %v1270 = vpack.c.b16 %v958, %v950
    %v1271 = vpack.c.b16 %v959, %v951
    %v1272 = vpack.c.b16 %v960, %v952
    %v1273 = vpack.c.b16 %v961, %v953
    %v1274 = vpack.c.b16 %v970, %v962
    %v1275 = vpack.c.b16 %v971, %v963
    %v1276 = vpack.c.b16 %v972, %v964
    %v1277 = vpack.c.b16 %v973, %v965
    %v1278 = vpack.c.b16 %v974, %v966
    %v1279 = vpack.c.b16 %v975, %v967
    %v1280 = vpack.c.b16 %v976, %v968
    %v1281 = vpack.c.b16 %v977, %v969
    %v1282 = vpack.c.b16 %v986, %v978
    %v1283 = vpack.c.b16 %v987, %v979
    %v1284 = vpack.c.b16 %v988, %v980
    %v1285 = vpack.c.b16 %v989, %v981
    %v1286 = vpack.c.b16 %v990, %v982
    %v1287 = vpack.c.b16 %v991, %v983
    %v1288 = vpack.c.b16 %v992, %v984
    %v1289 = vpack.c.b16 %v993, %v985
    %v1290 = vpack.c.b16 %v1002, %v994
    %v1291 = vpack.c.b16 %v1003, %v995
    %v1292 = vpack.c.b16 %v1004, %v996
    %v1293 = vpack.c.b16 %v1005, %v997
    %v1294 = vpack.c.b16 %v1006, %v998
    %v1295 = vpack.c.b16 %v1007, %v999
    %v1296 = vpack.c.b16 %v1008, %v1000
    %v1297 = vpack.c.b16 %v1009, %v1001
    %v1298 = vpack.c.b16 %v1018, %v1010
    %v1299 = vpack.c.b16 %v1019, %v1011
    %v1300 = vpack.c.b16 %v1020, %v1012
    %v1301 = vpack.c.b16 %v1021, %v1013
    %v1302 = vpack.c.b16 %v1022, %v1014
    %v1303 = vpack.c.b16 %v1023, %v1015
    %v1304 = vpack.c.b16 %v1024, %v1016
    %v1305 = vpack.c.b16 %v1025, %v1017
    %v1306 = vpack.c.b16 %v1034, %v1026
    %v1307 = vpack.c.b16 %v1035, %v1027
    %v1308 = vpack.c.b16 %v1036, %v1028
    %v1309 = vpack.c.b16 %v1037, %v1029
    %v1310 = vpack.c.b16 %v1038, %v1030
    %v1311 = vpack.c.b16 %v1039, %v1031
    %v1312 = vpack.c.b16 %v1040, %v1032
    %v1313 = vpack.c.b16 %v1041, %v1033
    %v1314 = vpack.c.b16 %v1050, %v1042
    %v1315 = vpack.c.b16 %v1051, %v1043
    %v1316 = vpack.c.b16 %v1052, %v1044
    %v1317 = vpack.c.b16 %v1053, %v1045
    %v1318 = vpack.c.b16 %v1054, %v1046
    %v1319 = vpack.c.b16 %v1055, %v1047
    %v1320 = vpack.c.b16 %v1056, %v1048
    %v1321 = vpack.c.b16 %v1057, %v1049
    %v1322 = vpack.c.b16 %v1066, %v1058
    %v1323 = vpack.c.b16 %v1067, %v1059
    %v1324 = vpack.c.b16 %v1068, %v1060
    %v1325 = vpack.c.b16 %v1069, %v1061
    %v1326 = vpack.c.b16 %v1070, %v1062
    %v1327 = vpack.c.b16 %v1071, %v1063
    %v1328 = vpack.c.b16 %v1072, %v1064
    %v1329 = vpack.c.b16 %v1073, %v1065
    %1586 = vmatpush.bf16.msra.mxu0 %v1130
    %1587 = vmatpush.bf16.msra.mxu0 %v1122
    %1588 = vmatpush.bf16.msra.mxu0 %v1114
    %1589 = vmatpush.bf16.msra.mxu0 %v1106
    %1590 = vmatpush.bf16.msra.mxu0 %v1098
    %1591 = vmatpush.bf16.msra.mxu0 %v1090
    %1592 = vmatpush.bf16.msra.mxu0 %v1082
    %1593 = vmatpush.bf16.msra.mxu0 %v1074
    %1594 = vmatmul.bf16.gmra.mxu0 %v298
    %v1595 = vpop.f32.mrf.mxu0
    %v1596 = vadd.f32 %v280, %v1595
    %v1597 = vpop.f32.mrf.mxu0
    %1598 = vdwg.mxu0
    %1599 = vmatpush.bf16.msra.mxu0 %v1194
    %1600 = vmatpush.bf16.msra.mxu0 %v1186
    %1601 = vmatpush.bf16.msra.mxu0 %v1178
    %1602 = vmatpush.bf16.msra.mxu0 %v1170
    %1603 = vmatpush.bf16.msra.mxu0 %v1162
    %1604 = vmatpush.bf16.msra.mxu0 %v1154
    %1605 = vmatpush.bf16.msra.mxu0 %v1146
    %1606 = vmatpush.bf16.msra.mxu0 %v1138
    %1607 = vmatmul.bf16.gmra.mxu0 %v299
    %v1608 = vpop.f32.mrf.mxu0
    %v1609 = vadd.f32 %v1596, %v1608
    %v1610 = vpop.f32.mrf.mxu0
    %1611 = vdwg.mxu0
    %1612 = vmatpush.bf16.msra.mxu0 %v1258
    %1613 = vmatpush.bf16.msra.mxu0 %v1250
    %1614 = vmatpush.bf16.msra.mxu0 %v1242
    %1615 = vmatpush.bf16.msra.mxu0 %v1234
    %1616 = vmatpush.bf16.msra.mxu0 %v1226
    %1617 = vmatpush.bf16.msra.mxu0 %v1218
    %1618 = vmatpush.bf16.msra.mxu0 %v1210
    %1619 = vmatpush.bf16.msra.mxu0 %v1202
    %1620 = vmatmul.bf16.gmra.mxu0 %v300
    %v1621 = vpop.f32.mrf.mxu0
    %v1622 = vadd.f32 %v1609, %v1621
    %v1623 = vpop.f32.mrf.mxu0
    %1624 = vdwg.mxu0
    %1625 = vmatpush.bf16.msra.mxu0 %v1322
    %1626 = vmatpush.bf16.msra.mxu0 %v1314
    %1627 = vmatpush.bf16.msra.mxu0 %v1306
    %1628 = vmatpush.bf16.msra.mxu0 %v1298
    %1629 = vmatpush.bf16.msra.mxu0 %v1290
    %1630 = vmatpush.bf16.msra.mxu0 %v1282
    %1631 = vmatpush.bf16.msra.mxu0 %v1274
    %1632 = vmatpush.bf16.msra.mxu0 %v1266
    %1633 = vmatmul.bf16.gmra.mxu0 %v301
    %v1634 = vpop.f32.mrf.mxu0
    %v1635 = vadd.f32 %v1622, %v1634
    %v1636 = vpop.f32.mrf.mxu0
    %1637 = vdwg.mxu0
    %1638 = vmatpush.bf16.msra.mxu0 %v1131
    %1639 = vmatpush.bf16.msra.mxu0 %v1123
    %1640 = vmatpush.bf16.msra.mxu0 %v1115
    %1641 = vmatpush.bf16.msra.mxu0 %v1107
    %1642 = vmatpush.bf16.msra.mxu0 %v1099
    %1643 = vmatpush.bf16.msra.mxu0 %v1091
    %1644 = vmatpush.bf16.msra.mxu0 %v1083
    %1645 = vmatpush.bf16.msra.mxu0 %v1075
    %1646 = vmatmul.bf16.gmra.mxu0 %v298
    %v1647 = vpop.f32.mrf.mxu0
    %v1648 = vadd.f32 %v281, %v1647
    %v1649 = vpop.f32.mrf.mxu0
    %1650 = vdwg.mxu0
    %1651 = vmatpush.bf16.msra.mxu0 %v1195
    %1652 = vmatpush.bf16.msra.mxu0 %v1187
    %1653 = vmatpush.bf16.msra.mxu0 %v1179
    %1654 = vmatpush.bf16.msra.mxu0 %v1171
    %1655 = vmatpush.bf16.msra.mxu0 %v1163
    %1656 = vmatpush.bf16.msra.mxu0 %v1155
    %1657 = vmatpush.bf16.msra.mxu0 %v1147
    %1658 = vmatpush.bf16.msra.mxu0 %v1139
    %1659 = vmatmul.bf16.gmra.mxu0 %v299
    %v1660 = vpop.f32.mrf.mxu0
    %v1661 = vadd.f32 %v1648, %v1660
    %v1662 = vpop.f32.mrf.mxu0
    %1663 = vdwg.mxu0
    %1664 = vmatpush.bf16.msra.mxu0 %v1259
    %1665 = vmatpush.bf16.msra.mxu0 %v1251
    %1666 = vmatpush.bf16.msra.mxu0 %v1243
    %1667 = vmatpush.bf16.msra.mxu0 %v1235
    %1668 = vmatpush.bf16.msra.mxu0 %v1227
    %1669 = vmatpush.bf16.msra.mxu0 %v1219
    %1670 = vmatpush.bf16.msra.mxu0 %v1211
    %1671 = vmatpush.bf16.msra.mxu0 %v1203
    %1672 = vmatmul.bf16.gmra.mxu0 %v300
    %v1673 = vpop.f32.mrf.mxu0
    %v1674 = vadd.f32 %v1661, %v1673
    %v1675 = vpop.f32.mrf.mxu0
    %1676 = vdwg.mxu0
    %1677 = vmatpush.bf16.msra.mxu0 %v1323
    %1678 = vmatpush.bf16.msra.mxu0 %v1315
    %1679 = vmatpush.bf16.msra.mxu0 %v1307
    %1680 = vmatpush.bf16.msra.mxu0 %v1299
    %1681 = vmatpush.bf16.msra.mxu0 %v1291
    %1682 = vmatpush.bf16.msra.mxu0 %v1283
    %1683 = vmatpush.bf16.msra.mxu0 %v1275
    %1684 = vmatpush.bf16.msra.mxu0 %v1267
    %1685 = vmatmul.bf16.gmra.mxu0 %v301
    %v1686 = vpop.f32.mrf.mxu0
    %v1687 = vadd.f32 %v1674, %v1686
    %v1688 = vpop.f32.mrf.mxu0
    %1689 = vdwg.mxu0
    %1690 = vmatpush.bf16.msra.mxu0 %v1132
    %1691 = vmatpush.bf16.msra.mxu0 %v1124
    %1692 = vmatpush.bf16.msra.mxu0 %v1116
    %1693 = vmatpush.bf16.msra.mxu0 %v1108
    %1694 = vmatpush.bf16.msra.mxu0 %v1100
    %1695 = vmatpush.bf16.msra.mxu0 %v1092
    %1696 = vmatpush.bf16.msra.mxu0 %v1084
    %1697 = vmatpush.bf16.msra.mxu0 %v1076
    %1698 = vmatmul.bf16.gmra.mxu0 %v298
    %v1699 = vpop.f32.mrf.mxu0
    %v1700 = vadd.f32 %v282, %v1699
    %v1701 = vpop.f32.mrf.mxu0
    %1702 = vdwg.mxu0
    %1703 = vmatpush.bf16.msra.mxu0 %v1196
    %1704 = vmatpush.bf16.msra.mxu0 %v1188
    %1705 = vmatpush.bf16.msra.mxu0 %v1180
    %1706 = vmatpush.bf16.msra.mxu0 %v1172
    %1707 = vmatpush.bf16.msra.mxu0 %v1164
    %1708 = vmatpush.bf16.msra.mxu0 %v1156
    %1709 = vmatpush.bf16.msra.mxu0 %v1148
    %1710 = vmatpush.bf16.msra.mxu0 %v1140
    %1711 = vmatmul.bf16.gmra.mxu0 %v299
    %v1712 = vpop.f32.mrf.mxu0
    %v1713 = vadd.f32 %v1700, %v1712
    %v1714 = vpop.f32.mrf.mxu0
    %1715 = vdwg.mxu0
    %1716 = vmatpush.bf16.msra.mxu0 %v1260
    %1717 = vmatpush.bf16.msra.mxu0 %v1252
    %1718 = vmatpush.bf16.msra.mxu0 %v1244
    %1719 = vmatpush.bf16.msra.mxu0 %v1236
    %1720 = vmatpush.bf16.msra.mxu0 %v1228
    %1721 = vmatpush.bf16.msra.mxu0 %v1220
    %1722 = vmatpush.bf16.msra.mxu0 %v1212
    %1723 = vmatpush.bf16.msra.mxu0 %v1204
    %1724 = vmatmul.bf16.gmra.mxu0 %v300
    %v1725 = vpop.f32.mrf.mxu0
    %v1726 = vadd.f32 %v1713, %v1725
    %v1727 = vpop.f32.mrf.mxu0
    %1728 = vdwg.mxu0
    %1729 = vmatpush.bf16.msra.mxu0 %v1324
    %1730 = vmatpush.bf16.msra.mxu0 %v1316
    %1731 = vmatpush.bf16.msra.mxu0 %v1308
    %1732 = vmatpush.bf16.msra.mxu0 %v1300
    %1733 = vmatpush.bf16.msra.mxu0 %v1292
    %1734 = vmatpush.bf16.msra.mxu0 %v1284
    %1735 = vmatpush.bf16.msra.mxu0 %v1276
    %1736 = vmatpush.bf16.msra.mxu0 %v1268
    %1737 = vmatmul.bf16.gmra.mxu0 %v301
    %v1738 = vpop.f32.mrf.mxu0
    %v1739 = vadd.f32 %v1726, %v1738
    %v1740 = vpop.f32.mrf.mxu0
    %1741 = vdwg.mxu0
    %1742 = vmatpush.bf16.msra.mxu0 %v1133
    %1743 = vmatpush.bf16.msra.mxu0 %v1125
    %1744 = vmatpush.bf16.msra.mxu0 %v1117
    %1745 = vmatpush.bf16.msra.mxu0 %v1109
    %1746 = vmatpush.bf16.msra.mxu0 %v1101
    %1747 = vmatpush.bf16.msra.mxu0 %v1093
    %1748 = vmatpush.bf16.msra.mxu0 %v1085
    %1749 = vmatpush.bf16.msra.mxu0 %v1077
    %1750 = vmatmul.bf16.gmra.mxu0 %v298
    %v1751 = vpop.f32.mrf.mxu0
    %v1752 = vadd.f32 %v283, %v1751
    %v1753 = vpop.f32.mrf.mxu0
    %1754 = vdwg.mxu0
    %1755 = vmatpush.bf16.msra.mxu0 %v1197
    %1756 = vmatpush.bf16.msra.mxu0 %v1189
    %1757 = vmatpush.bf16.msra.mxu0 %v1181
    %1758 = vmatpush.bf16.msra.mxu0 %v1173
    %1759 = vmatpush.bf16.msra.mxu0 %v1165
    %1760 = vmatpush.bf16.msra.mxu0 %v1157
    %1761 = vmatpush.bf16.msra.mxu0 %v1149
    %1762 = vmatpush.bf16.msra.mxu0 %v1141
    %1763 = vmatmul.bf16.gmra.mxu0 %v299
    %v1764 = vpop.f32.mrf.mxu0
    %v1765 = vadd.f32 %v1752, %v1764
    %v1766 = vpop.f32.mrf.mxu0
    %1767 = vdwg.mxu0
    %1768 = vmatpush.bf16.msra.mxu0 %v1261
    %1769 = vmatpush.bf16.msra.mxu0 %v1253
    %1770 = vmatpush.bf16.msra.mxu0 %v1245
    %1771 = vmatpush.bf16.msra.mxu0 %v1237
    %1772 = vmatpush.bf16.msra.mxu0 %v1229
    %1773 = vmatpush.bf16.msra.mxu0 %v1221
    %1774 = vmatpush.bf16.msra.mxu0 %v1213
    %1775 = vmatpush.bf16.msra.mxu0 %v1205
    %1776 = vmatmul.bf16.gmra.mxu0 %v300
    %v1777 = vpop.f32.mrf.mxu0
    %v1778 = vadd.f32 %v1765, %v1777
    %v1779 = vpop.f32.mrf.mxu0
    %1780 = vdwg.mxu0
    %1781 = vmatpush.bf16.msra.mxu0 %v1325
    %1782 = vmatpush.bf16.msra.mxu0 %v1317
    %1783 = vmatpush.bf16.msra.mxu0 %v1309
    %1784 = vmatpush.bf16.msra.mxu0 %v1301
    %1785 = vmatpush.bf16.msra.mxu0 %v1293
    %1786 = vmatpush.bf16.msra.mxu0 %v1285
    %1787 = vmatpush.bf16.msra.mxu0 %v1277
    %1788 = vmatpush.bf16.msra.mxu0 %v1269
    %1789 = vmatmul.bf16.gmra.mxu0 %v301
    %v1790 = vpop.f32.mrf.mxu0
    %v1791 = vadd.f32 %v1778, %v1790
    %v1792 = vpop.f32.mrf.mxu0
    %1793 = vdwg.mxu0
    %1794 = vmatpush.bf16.msra.mxu0 %v1134
    %1795 = vmatpush.bf16.msra.mxu0 %v1126
    %1796 = vmatpush.bf16.msra.mxu0 %v1118
    %1797 = vmatpush.bf16.msra.mxu0 %v1110
    %1798 = vmatpush.bf16.msra.mxu0 %v1102
    %1799 = vmatpush.bf16.msra.mxu0 %v1094
    %1800 = vmatpush.bf16.msra.mxu0 %v1086
    %1801 = vmatpush.bf16.msra.mxu0 %v1078
    %1802 = vmatmul.bf16.gmra.mxu0 %v298
    %v1803 = vpop.f32.mrf.mxu0
    %v1804 = vadd.f32 %v284, %v1803
    %v1805 = vpop.f32.mrf.mxu0
    %1806 = vdwg.mxu0
    %1807 = vmatpush.bf16.msra.mxu0 %v1198
    %1808 = vmatpush.bf16.msra.mxu0 %v1190
    %1809 = vmatpush.bf16.msra.mxu0 %v1182
    %1810 = vmatpush.bf16.msra.mxu0 %v1174
    %1811 = vmatpush.bf16.msra.mxu0 %v1166
    %1812 = vmatpush.bf16.msra.mxu0 %v1158
    %1813 = vmatpush.bf16.msra.mxu0 %v1150
    %1814 = vmatpush.bf16.msra.mxu0 %v1142
    %1815 = vmatmul.bf16.gmra.mxu0 %v299
    %v1816 = vpop.f32.mrf.mxu0
    %v1817 = vadd.f32 %v1804, %v1816
    %v1818 = vpop.f32.mrf.mxu0
    %1819 = vdwg.mxu0
    %1820 = vmatpush.bf16.msra.mxu0 %v1262
    %1821 = vmatpush.bf16.msra.mxu0 %v1254
    %1822 = vmatpush.bf16.msra.mxu0 %v1246
    %1823 = vmatpush.bf16.msra.mxu0 %v1238
    %1824 = vmatpush.bf16.msra.mxu0 %v1230
    %1825 = vmatpush.bf16.msra.mxu0 %v1222
    %1826 = vmatpush.bf16.msra.mxu0 %v1214
    %1827 = vmatpush.bf16.msra.mxu0 %v1206
    %1828 = vmatmul.bf16.gmra.mxu0 %v300
    %v1829 = vpop.f32.mrf.mxu0
    %v1830 = vadd.f32 %v1817, %v1829
    %v1831 = vpop.f32.mrf.mxu0
    %1832 = vdwg.mxu0
    %1833 = vmatpush.bf16.msra.mxu0 %v1326
    %1834 = vmatpush.bf16.msra.mxu0 %v1318
    %1835 = vmatpush.bf16.msra.mxu0 %v1310
    %1836 = vmatpush.bf16.msra.mxu0 %v1302
    %1837 = vmatpush.bf16.msra.mxu0 %v1294
    %1838 = vmatpush.bf16.msra.mxu0 %v1286
    %1839 = vmatpush.bf16.msra.mxu0 %v1278
    %1840 = vmatpush.bf16.msra.mxu0 %v1270
    %1841 = vmatmul.bf16.gmra.mxu0 %v301
    %v1842 = vpop.f32.mrf.mxu0
    %v1843 = vadd.f32 %v1830, %v1842
    %v1844 = vpop.f32.mrf.mxu0
    %1845 = vdwg.mxu0
    %1846 = vmatpush.bf16.msra.mxu0 %v1135
    %1847 = vmatpush.bf16.msra.mxu0 %v1127
    %1848 = vmatpush.bf16.msra.mxu0 %v1119
    %1849 = vmatpush.bf16.msra.mxu0 %v1111
    %1850 = vmatpush.bf16.msra.mxu0 %v1103
    %1851 = vmatpush.bf16.msra.mxu0 %v1095
    %1852 = vmatpush.bf16.msra.mxu0 %v1087
    %1853 = vmatpush.bf16.msra.mxu0 %v1079
    %1854 = vmatmul.bf16.gmra.mxu0 %v298
    %v1855 = vpop.f32.mrf.mxu0
    %v1856 = vadd.f32 %v285, %v1855
    %v1857 = vpop.f32.mrf.mxu0
    %1858 = vdwg.mxu0
    %1859 = vmatpush.bf16.msra.mxu0 %v1199
    %1860 = vmatpush.bf16.msra.mxu0 %v1191
    %1861 = vmatpush.bf16.msra.mxu0 %v1183
    %1862 = vmatpush.bf16.msra.mxu0 %v1175
    %1863 = vmatpush.bf16.msra.mxu0 %v1167
    %1864 = vmatpush.bf16.msra.mxu0 %v1159
    %1865 = vmatpush.bf16.msra.mxu0 %v1151
    %1866 = vmatpush.bf16.msra.mxu0 %v1143
    %1867 = vmatmul.bf16.gmra.mxu0 %v299
    %v1868 = vpop.f32.mrf.mxu0
    %v1869 = vadd.f32 %v1856, %v1868
    %v1870 = vpop.f32.mrf.mxu0
    %1871 = vdwg.mxu0
    %1872 = vmatpush.bf16.msra.mxu0 %v1263
    %1873 = vmatpush.bf16.msra.mxu0 %v1255
    %1874 = vmatpush.bf16.msra.mxu0 %v1247
    %1875 = vmatpush.bf16.msra.mxu0 %v1239
    %1876 = vmatpush.bf16.msra.mxu0 %v1231
    %1877 = vmatpush.bf16.msra.mxu0 %v1223
    %1878 = vmatpush.bf16.msra.mxu0 %v1215
    %1879 = vmatpush.bf16.msra.mxu0 %v1207
    %1880 = vmatmul.bf16.gmra.mxu0 %v300
    %v1881 = vpop.f32.mrf.mxu0
    %v1882 = vadd.f32 %v1869, %v1881
    %v1883 = vpop.f32.mrf.mxu0
    %1884 = vdwg.mxu0
    %1885 = vmatpush.bf16.msra.mxu0 %v1327
    %1886 = vmatpush.bf16.msra.mxu0 %v1319
    %1887 = vmatpush.bf16.msra.mxu0 %v1311
    %1888 = vmatpush.bf16.msra.mxu0 %v1303
    %1889 = vmatpush.bf16.msra.mxu0 %v1295
    %1890 = vmatpush.bf16.msra.mxu0 %v1287
    %1891 = vmatpush.bf16.msra.mxu0 %v1279
    %1892 = vmatpush.bf16.msra.mxu0 %v1271
    %1893 = vmatmul.bf16.gmra.mxu0 %v301
    %v1894 = vpop.f32.mrf.mxu0
    %v1895 = vadd.f32 %v1882, %v1894
    %v1896 = vpop.f32.mrf.mxu0
    %1897 = vdwg.mxu0
    %1898 = vmatpush.bf16.msra.mxu0 %v1136
    %1899 = vmatpush.bf16.msra.mxu0 %v1128
    %1900 = vmatpush.bf16.msra.mxu0 %v1120
    %1901 = vmatpush.bf16.msra.mxu0 %v1112
    %1902 = vmatpush.bf16.msra.mxu0 %v1104
    %1903 = vmatpush.bf16.msra.mxu0 %v1096
    %1904 = vmatpush.bf16.msra.mxu0 %v1088
    %1905 = vmatpush.bf16.msra.mxu0 %v1080
    %1906 = vmatmul.bf16.gmra.mxu0 %v298
    %v1907 = vpop.f32.mrf.mxu0
    %v1908 = vadd.f32 %v286, %v1907
    %v1909 = vpop.f32.mrf.mxu0
    %1910 = vdwg.mxu0
    %1911 = vmatpush.bf16.msra.mxu0 %v1200
    %1912 = vmatpush.bf16.msra.mxu0 %v1192
    %1913 = vmatpush.bf16.msra.mxu0 %v1184
    %1914 = vmatpush.bf16.msra.mxu0 %v1176
    %1915 = vmatpush.bf16.msra.mxu0 %v1168
    %1916 = vmatpush.bf16.msra.mxu0 %v1160
    %1917 = vmatpush.bf16.msra.mxu0 %v1152
    %1918 = vmatpush.bf16.msra.mxu0 %v1144
    %1919 = vmatmul.bf16.gmra.mxu0 %v299
    %v1920 = vpop.f32.mrf.mxu0
    %v1921 = vadd.f32 %v1908, %v1920
    %v1922 = vpop.f32.mrf.mxu0
    %1923 = vdwg.mxu0
    %1924 = vmatpush.bf16.msra.mxu0 %v1264
    %1925 = vmatpush.bf16.msra.mxu0 %v1256
    %1926 = vmatpush.bf16.msra.mxu0 %v1248
    %1927 = vmatpush.bf16.msra.mxu0 %v1240
    %1928 = vmatpush.bf16.msra.mxu0 %v1232
    %1929 = vmatpush.bf16.msra.mxu0 %v1224
    %1930 = vmatpush.bf16.msra.mxu0 %v1216
    %1931 = vmatpush.bf16.msra.mxu0 %v1208
    %1932 = vmatmul.bf16.gmra.mxu0 %v300
    %v1933 = vpop.f32.mrf.mxu0
    %v1934 = vadd.f32 %v1921, %v1933
    %v1935 = vpop.f32.mrf.mxu0
    %1936 = vdwg.mxu0
    %1937 = vmatpush.bf16.msra.mxu0 %v1328
    %1938 = vmatpush.bf16.msra.mxu0 %v1320
    %1939 = vmatpush.bf16.msra.mxu0 %v1312
    %1940 = vmatpush.bf16.msra.mxu0 %v1304
    %1941 = vmatpush.bf16.msra.mxu0 %v1296
    %1942 = vmatpush.bf16.msra.mxu0 %v1288
    %1943 = vmatpush.bf16.msra.mxu0 %v1280
    %1944 = vmatpush.bf16.msra.mxu0 %v1272
    %1945 = vmatmul.bf16.gmra.mxu0 %v301
    %v1946 = vpop.f32.mrf.mxu0
    %v1947 = vadd.f32 %v1934, %v1946
    %v1948 = vpop.f32.mrf.mxu0
    %1949 = vdwg.mxu0
    %1950 = vmatpush.bf16.msra.mxu0 %v1137
    %1951 = vmatpush.bf16.msra.mxu0 %v1129
    %1952 = vmatpush.bf16.msra.mxu0 %v1121
    %1953 = vmatpush.bf16.msra.mxu0 %v1113
    %1954 = vmatpush.bf16.msra.mxu0 %v1105
    %1955 = vmatpush.bf16.msra.mxu0 %v1097
    %1956 = vmatpush.bf16.msra.mxu0 %v1089
    %1957 = vmatpush.bf16.msra.mxu0 %v1081
    %1958 = vmatmul.bf16.gmra.mxu0 %v298
    %v1959 = vpop.f32.mrf.mxu0
    %v1960 = vadd.f32 %v287, %v1959
    %v1961 = vpop.f32.mrf.mxu0
    %1962 = vdwg.mxu0
    %1963 = vmatpush.bf16.msra.mxu0 %v1201
    %1964 = vmatpush.bf16.msra.mxu0 %v1193
    %1965 = vmatpush.bf16.msra.mxu0 %v1185
    %1966 = vmatpush.bf16.msra.mxu0 %v1177
    %1967 = vmatpush.bf16.msra.mxu0 %v1169
    %1968 = vmatpush.bf16.msra.mxu0 %v1161
    %1969 = vmatpush.bf16.msra.mxu0 %v1153
    %1970 = vmatpush.bf16.msra.mxu0 %v1145
    %1971 = vmatmul.bf16.gmra.mxu0 %v299
    %v1972 = vpop.f32.mrf.mxu0
    %v1973 = vadd.f32 %v1960, %v1972
    %v1974 = vpop.f32.mrf.mxu0
    %1975 = vdwg.mxu0
    %1976 = vmatpush.bf16.msra.mxu0 %v1265
    %1977 = vmatpush.bf16.msra.mxu0 %v1257
    %1978 = vmatpush.bf16.msra.mxu0 %v1249
    %1979 = vmatpush.bf16.msra.mxu0 %v1241
    %1980 = vmatpush.bf16.msra.mxu0 %v1233
    %1981 = vmatpush.bf16.msra.mxu0 %v1225
    %1982 = vmatpush.bf16.msra.mxu0 %v1217
    %1983 = vmatpush.bf16.msra.mxu0 %v1209
    %1984 = vmatmul.bf16.gmra.mxu0 %v300
    %v1985 = vpop.f32.mrf.mxu0
    %v1986 = vadd.f32 %v1973, %v1985
    %v1987 = vpop.f32.mrf.mxu0
    %1988 = vdwg.mxu0
    %1989 = vmatpush.bf16.msra.mxu0 %v1329
    %1990 = vmatpush.bf16.msra.mxu0 %v1321
    %1991 = vmatpush.bf16.msra.mxu0 %v1313
    %1992 = vmatpush.bf16.msra.mxu0 %v1305
    %1993 = vmatpush.bf16.msra.mxu0 %v1297
    %1994 = vmatpush.bf16.msra.mxu0 %v1289
    %1995 = vmatpush.bf16.msra.mxu0 %v1281
    %1996 = vmatpush.bf16.msra.mxu0 %v1273
    %1997 = vmatmul.bf16.gmra.mxu0 %v301
    %v1998 = vpop.f32.mrf.mxu0
    %v1999 = vadd.f32 %v1986, %v1998
    %v2000 = vpop.f32.mrf.mxu0
    %2001 = vdwg.mxu0
    %v2002 = vmax.f32 %v1635, 0.0
    %v2003 = vmax.f32 %v1687, 0.0
    %v2004 = vmax.f32 %v1739, 0.0
    %v2005 = vmax.f32 %v1791, 0.0
    %v2006 = vmax.f32 %v1843, 0.0
    %v2007 = vmax.f32 %v1895, 0.0
    %v2008 = vmax.f32 %v1947, 0.0
    %v2009 = vmax.f32 %v1999, 0.0
    %v2010 = vpack.c.bf16 %v2002, %v2002
    %v2011 = vpack.c.bf16 %v2003, %v2003
    %v2012 = vpack.c.bf16 %v2004, %v2004
    %v2013 = vpack.c.bf16 %v2005, %v2005
    %v2014 = vpack.c.bf16 %v2006, %v2006
    %v2015 = vpack.c.bf16 %v2007, %v2007
    %v2016 = vpack.c.bf16 %v2008, %v2008
    %v2017 = vpack.c.bf16 %v2009, %v2009
    %v2018 = vld [vmem:[%s3] sm:$0xf]
    %v2019 = vld [vmem:[%s3 + $0x4] sm:$0xf]
    %v2020 = vld [vmem:[%s3 + $0x8] sm:$0xf]
    %v2021 = vld [vmem:[%s3 + $0xc] sm:$0xf]
    %v2022 = vld [vmem:[%s3 + $0x10] sm:$0xf]
    %v2023 = vld [vmem:[%s3 + $0x14] sm:$0xf]
    %v2024 = vld [vmem:[%s3 + $0x18] sm:$0xf]
    %v2025 = vld [vmem:[%s3 + $0x1c] sm:$0xf]
    %v2026 = vld [vmem:[%s3 + $0x20] sm:$0xf]
    %v2027 = vld [vmem:[%s3 + $0x24] sm:$0xf]
    %v2028 = vld [vmem:[%s3 + $0x28] sm:$0xf]
    %v2029 = vld [vmem:[%s3 + $0x2c] sm:$0xf]
    %v2030 = vld [vmem:[%s3 + $0x30] sm:$0xf]
    %v2031 = vld [vmem:[%s3 + $0x34] sm:$0xf]
    %v2032 = vld [vmem:[%s3 + $0x38] sm:$0xf]
    %v2033 = vld [vmem:[%s3 + $0x3c] sm:$0xf]
    %v2034 = vld [vmem:[%s3 + $0x40] sm:$0xf]
    %v2035 = vld [vmem:[%s3 + $0x44] sm:$0xf]
    %v2036 = vld [vmem:[%s3 + $0x48] sm:$0xf]
    %v2037 = vld [vmem:[%s3 + $0x4c] sm:$0xf]
    %v2038 = vld [vmem:[%s3 + $0x50] sm:$0xf]
    %v2039 = vld [vmem:[%s3 + $0x54] sm:$0xf]
    %v2040 = vld [vmem:[%s3 + $0x58] sm:$0xf]
    %v2041 = vld [vmem:[%s3 + $0x5c] sm:$0xf]
    %v2042 = vld [vmem:[%s3 + $0x60] sm:$0xf]
    %v2043 = vld [vmem:[%s3 + $0x64] sm:$0xf]
    %v2044 = vld [vmem:[%s3 + $0x68] sm:$0xf]
    %v2045 = vld [vmem:[%s3 + $0x6c] sm:$0xf]
    %v2046 = vld [vmem:[%s3 + $0x70] sm:$0xf]
    %v2047 = vld [vmem:[%s3 + $0x74] sm:$0xf]
    %v2048 = vld [vmem:[%s3 + $0x78] sm:$0xf]
    %v2049 = vld [vmem:[%s3 + $0x7c] sm:$0xf]
    %v2050 = vld [vmem:[%s3 + $0x80] sm:$0xf]
    %v2051 = vld [vmem:[%s3 + $0x84] sm:$0xf]
    %v2052 = vld [vmem:[%s3 + $0x88] sm:$0xf]
    %v2053 = vld [vmem:[%s3 + $0x8c] sm:$0xf]
    %v2054 = vld [vmem:[%s3 + $0x90] sm:$0xf]
    %v2055 = vld [vmem:[%s3 + $0x94] sm:$0xf]
    %v2056 = vld [vmem:[%s3 + $0x98] sm:$0xf]
    %v2057 = vld [vmem:[%s3 + $0x9c] sm:$0xf]
    %v2058 = vld [vmem:[%s3 + $0xa0] sm:$0xf]
    %v2059 = vld [vmem:[%s3 + $0xa4] sm:$0xf]
    %v2060 = vld [vmem:[%s3 + $0xa8] sm:$0xf]
    %v2061 = vld [vmem:[%s3 + $0xac] sm:$0xf]
    %v2062 = vld [vmem:[%s3 + $0xb0] sm:$0xf]
    %v2063 = vld [vmem:[%s3 + $0xb4] sm:$0xf]
    %v2064 = vld [vmem:[%s3 + $0xb8] sm:$0xf]
    %v2065 = vld [vmem:[%s3 + $0xbc] sm:$0xf]
    %v2066 = vld [vmem:[%s3 + $0xc0] sm:$0xf]
    %v2067 = vld [vmem:[%s3 + $0xc4] sm:$0xf]
    %v2068 = vld [vmem:[%s3 + $0xc8] sm:$0xf]
    %v2069 = vld [vmem:[%s3 + $0xcc] sm:$0xf]
    %v2070 = vld [vmem:[%s3 + $0xd0] sm:$0xf]
    %v2071 = vld [vmem:[%s3 + $0xd4] sm:$0xf]
    %v2072 = vld [vmem:[%s3 + $0xd8] sm:$0xf]
    %v2073 = vld [vmem:[%s3 + $0xdc] sm:$0xf]
    %v2074 = vld [vmem:[%s3 + $0xe0] sm:$0xf]
    %v2075 = vld [vmem:[%s3 + $0xe4] sm:$0xf]
    %v2076 = vld [vmem:[%s3 + $0xe8] sm:$0xf]
    %v2077 = vld [vmem:[%s3 + $0xec] sm:$0xf]
    %v2078 = vld [vmem:[%s3 + $0xf0] sm:$0xf]
    %v2079 = vld [vmem:[%s3 + $0xf4] sm:$0xf]
    %v2080 = vld [vmem:[%s3 + $0xf8] sm:$0xf]
    %v2081 = vld [vmem:[%s3 + $0xfc] sm:$0xf]
    %v2082 = vld [vmem:[%s3 + $0x100] sm:$0xf]
    %v2083 = vld [vmem:[%s3 + $0x104] sm:$0xf]
    %v2084 = vld [vmem:[%s3 + $0x108] sm:$0xf]
    %v2085 = vld [vmem:[%s3 + $0x10c] sm:$0xf]
    %v2086 = vld [vmem:[%s3 + $0x110] sm:$0xf]
    %v2087 = vld [vmem:[%s3 + $0x114] sm:$0xf]
    %v2088 = vld [vmem:[%s3 + $0x118] sm:$0xf]
    %v2089 = vld [vmem:[%s3 + $0x11c] sm:$0xf]
    %v2090 = vld [vmem:[%s3 + $0x120] sm:$0xf]
    %v2091 = vld [vmem:[%s3 + $0x124] sm:$0xf]
    %v2092 = vld [vmem:[%s3 + $0x128] sm:$0xf]
    %v2093 = vld [vmem:[%s3 + $0x12c] sm:$0xf]
    %v2094 = vld [vmem:[%s3 + $0x130] sm:$0xf]
    %v2095 = vld [vmem:[%s3 + $0x134] sm:$0xf]
    %v2096 = vld [vmem:[%s3 + $0x138] sm:$0xf]
    %v2097 = vld [vmem:[%s3 + $0x13c] sm:$0xf]
    %v2098 = vld [vmem:[%s3 + $0x140] sm:$0xf]
    %v2099 = vld [vmem:[%s3 + $0x144] sm:$0xf]
    %v2100 = vld [vmem:[%s3 + $0x148] sm:$0xf]
    %v2101 = vld [vmem:[%s3 + $0x14c] sm:$0xf]
    %v2102 = vld [vmem:[%s3 + $0x150] sm:$0xf]
    %v2103 = vld [vmem:[%s3 + $0x154] sm:$0xf]
    %v2104 = vld [vmem:[%s3 + $0x158] sm:$0xf]
    %v2105 = vld [vmem:[%s3 + $0x15c] sm:$0xf]
    %v2106 = vld [vmem:[%s3 + $0x160] sm:$0xf]
    %v2107 = vld [vmem:[%s3 + $0x164] sm:$0xf]
    %v2108 = vld [vmem:[%s3 + $0x168] sm:$0xf]
    %v2109 = vld [vmem:[%s3 + $0x16c] sm:$0xf]
    %v2110 = vld [vmem:[%s3 + $0x170] sm:$0xf]
    %v2111 = vld [vmem:[%s3 + $0x174] sm:$0xf]
    %v2112 = vld [vmem:[%s3 + $0x178] sm:$0xf]
    %v2113 = vld [vmem:[%s3 + $0x17c] sm:$0xf]
    %v2114 = vld [vmem:[%s3 + $0x180] sm:$0xf]
    %v2115 = vld [vmem:[%s3 + $0x184] sm:$0xf]
    %v2116 = vld [vmem:[%s3 + $0x188] sm:$0xf]
    %v2117 = vld [vmem:[%s3 + $0x18c] sm:$0xf]
    %v2118 = vld [vmem:[%s3 + $0x190] sm:$0xf]
    %v2119 = vld [vmem:[%s3 + $0x194] sm:$0xf]
    %v2120 = vld [vmem:[%s3 + $0x198] sm:$0xf]
    %v2121 = vld [vmem:[%s3 + $0x19c] sm:$0xf]
    %v2122 = vld [vmem:[%s3 + $0x1a0] sm:$0xf]
    %v2123 = vld [vmem:[%s3 + $0x1a4] sm:$0xf]
    %v2124 = vld [vmem:[%s3 + $0x1a8] sm:$0xf]
    %v2125 = vld [vmem:[%s3 + $0x1ac] sm:$0xf]
    %v2126 = vld [vmem:[%s3 + $0x1b0] sm:$0xf]
    %v2127 = vld [vmem:[%s3 + $0x1b4] sm:$0xf]
    %v2128 = vld [vmem:[%s3 + $0x1b8] sm:$0xf]
    %v2129 = vld [vmem:[%s3 + $0x1bc] sm:$0xf]
    %v2130 = vld [vmem:[%s3 + $0x1c0] sm:$0xf]
    %v2131 = vld [vmem:[%s3 + $0x1c4] sm:$0xf]
    %v2132 = vld [vmem:[%s3 + $0x1c8] sm:$0xf]
    %v2133 = vld [vmem:[%s3 + $0x1cc] sm:$0xf]
    %v2134 = vld [vmem:[%s3 + $0x1d0] sm:$0xf]
    %v2135 = vld [vmem:[%s3 + $0x1d4] sm:$0xf]
    %v2136 = vld [vmem:[%s3 + $0x1d8] sm:$0xf]
    %v2137 = vld [vmem:[%s3 + $0x1dc] sm:$0xf]
    %v2138 = vld [vmem:[%s3 + $0x1e0] sm:$0xf]
    %v2139 = vld [vmem:[%s3 + $0x1e4] sm:$0xf]
    %v2140 = vld [vmem:[%s3 + $0x1e8] sm:$0xf]
    %v2141 = vld [vmem:[%s3 + $0x1ec] sm:$0xf]
    %v2142 = vld [vmem:[%s3 + $0x1f0] sm:$0xf]
    %v2143 = vld [vmem:[%s3 + $0x1f4] sm:$0xf]
    %v2144 = vld [vmem:[%s3 + $0x1f8] sm:$0xf]
    %v2145 = vld [vmem:[%s3 + $0x1fc] sm:$0xf]
    %v2146 = vld [vmem:[%s4] sm:$0x1]
    %v2148 = vperm.slane %v2146, 0
    %v2278 = vunpack.c.l.b16 %v2018
    %v2279 = vunpack.c.l.b16 %v2019
    %v2280 = vunpack.c.l.b16 %v2020
    %v2281 = vunpack.c.l.b16 %v2021
    %v2282 = vunpack.c.l.b16 %v2022
    %v2283 = vunpack.c.l.b16 %v2023
    %v2284 = vunpack.c.l.b16 %v2024
    %v2285 = vunpack.c.l.b16 %v2025
    %v2286 = vunpack.c.l.b16 %v2026
    %v2287 = vunpack.c.l.b16 %v2027
    %v2288 = vunpack.c.l.b16 %v2028
    %v2289 = vunpack.c.l.b16 %v2029
    %v2290 = vunpack.c.l.b16 %v2030
    %v2291 = vunpack.c.l.b16 %v2031
    %v2292 = vunpack.c.l.b16 %v2032
    %v2293 = vunpack.c.l.b16 %v2033
    %v2294 = vunpack.c.l.b16 %v2034
    %v2295 = vunpack.c.l.b16 %v2035
    %v2296 = vunpack.c.l.b16 %v2036
    %v2297 = vunpack.c.l.b16 %v2037
    %v2298 = vunpack.c.l.b16 %v2038
    %v2299 = vunpack.c.l.b16 %v2039
    %v2300 = vunpack.c.l.b16 %v2040
    %v2301 = vunpack.c.l.b16 %v2041
    %v2302 = vunpack.c.l.b16 %v2042
    %v2303 = vunpack.c.l.b16 %v2043
    %v2304 = vunpack.c.l.b16 %v2044
    %v2305 = vunpack.c.l.b16 %v2045
    %v2306 = vunpack.c.l.b16 %v2046
    %v2307 = vunpack.c.l.b16 %v2047
    %v2308 = vunpack.c.l.b16 %v2048
    %v2309 = vunpack.c.l.b16 %v2049
    %v2310 = vunpack.c.l.b16 %v2050
    %v2311 = vunpack.c.l.b16 %v2051
    %v2312 = vunpack.c.l.b16 %v2052
    %v2313 = vunpack.c.l.b16 %v2053
    %v2314 = vunpack.c.l.b16 %v2054
    %v2315 = vunpack.c.l.b16 %v2055
    %v2316 = vunpack.c.l.b16 %v2056
    %v2317 = vunpack.c.l.b16 %v2057
    %v2318 = vunpack.c.l.b16 %v2058
    %v2319 = vunpack.c.l.b16 %v2059
    %v2320 = vunpack.c.l.b16 %v2060
    %v2321 = vunpack.c.l.b16 %v2061
    %v2322 = vunpack.c.l.b16 %v2062
    %v2323 = vunpack.c.l.b16 %v2063
    %v2324 = vunpack.c.l.b16 %v2064
    %v2325 = vunpack.c.l.b16 %v2065
    %v2326 = vunpack.c.l.b16 %v2066
    %v2327 = vunpack.c.l.b16 %v2067
    %v2328 = vunpack.c.l.b16 %v2068
    %v2329 = vunpack.c.l.b16 %v2069
    %v2330 = vunpack.c.l.b16 %v2070
    %v2331 = vunpack.c.l.b16 %v2071
    %v2332 = vunpack.c.l.b16 %v2072
    %v2333 = vunpack.c.l.b16 %v2073
    %v2334 = vunpack.c.l.b16 %v2074
    %v2335 = vunpack.c.l.b16 %v2075
    %v2336 = vunpack.c.l.b16 %v2076
    %v2337 = vunpack.c.l.b16 %v2077
    %v2338 = vunpack.c.l.b16 %v2078
    %v2339 = vunpack.c.l.b16 %v2079
    %v2340 = vunpack.c.l.b16 %v2080
    %v2341 = vunpack.c.l.b16 %v2081
    %v2342 = vunpack.c.l.b16 %v2082
    %v2343 = vunpack.c.l.b16 %v2083
    %v2344 = vunpack.c.l.b16 %v2084
    %v2345 = vunpack.c.l.b16 %v2085
    %v2346 = vunpack.c.l.b16 %v2086
    %v2347 = vunpack.c.l.b16 %v2087
    %v2348 = vunpack.c.l.b16 %v2088
    %v2349 = vunpack.c.l.b16 %v2089
    %v2350 = vunpack.c.l.b16 %v2090
    %v2351 = vunpack.c.l.b16 %v2091
    %v2352 = vunpack.c.l.b16 %v2092
    %v2353 = vunpack.c.l.b16 %v2093
    %v2354 = vunpack.c.l.b16 %v2094
    %v2355 = vunpack.c.l.b16 %v2095
    %v2356 = vunpack.c.l.b16 %v2096
    %v2357 = vunpack.c.l.b16 %v2097
    %v2358 = vunpack.c.l.b16 %v2098
    %v2359 = vunpack.c.l.b16 %v2099
    %v2360 = vunpack.c.l.b16 %v2100
    %v2361 = vunpack.c.l.b16 %v2101
    %v2362 = vunpack.c.l.b16 %v2102
    %v2363 = vunpack.c.l.b16 %v2103
    %v2364 = vunpack.c.l.b16 %v2104
    %v2365 = vunpack.c.l.b16 %v2105
    %v2366 = vunpack.c.l.b16 %v2106
    %v2367 = vunpack.c.l.b16 %v2107
    %v2368 = vunpack.c.l.b16 %v2108
    %v2369 = vunpack.c.l.b16 %v2109
    %v2370 = vunpack.c.l.b16 %v2110
    %v2371 = vunpack.c.l.b16 %v2111
    %v2372 = vunpack.c.l.b16 %v2112
    %v2373 = vunpack.c.l.b16 %v2113
    %v2374 = vunpack.c.l.b16 %v2114
    %v2375 = vunpack.c.l.b16 %v2115
    %v2376 = vunpack.c.l.b16 %v2116
    %v2377 = vunpack.c.l.b16 %v2117
    %v2378 = vunpack.c.l.b16 %v2118
    %v2379 = vunpack.c.l.b16 %v2119
    %v2380 = vunpack.c.l.b16 %v2120
    %v2381 = vunpack.c.l.b16 %v2121
    %v2382 = vunpack.c.l.b16 %v2122
    %v2383 = vunpack.c.l.b16 %v2123
    %v2384 = vunpack.c.l.b16 %v2124
    %v2385 = vunpack.c.l.b16 %v2125
    %v2386 = vunpack.c.l.b16 %v2126
    %v2387 = vunpack.c.l.b16 %v2127
    %v2388 = vunpack.c.l.b16 %v2128
    %v2389 = vunpack.c.l.b16 %v2129
    %v2390 = vunpack.c.l.b16 %v2130
    %v2391 = vunpack.c.l.b16 %v2131
    %v2392 = vunpack.c.l.b16 %v2132
    %v2393 = vunpack.c.l.b16 %v2133
    %v2394 = vunpack.c.l.b16 %v2134
    %v2395 = vunpack.c.l.b16 %v2135
    %v2396 = vunpack.c.l.b16 %v2136
    %v2397 = vunpack.c.l.b16 %v2137
    %v2398 = vunpack.c.l.b16 %v2138
    %v2399 = vunpack.c.l.b16 %v2139
    %v2400 = vunpack.c.l.b16 %v2140
    %v2401 = vunpack.c.l.b16 %v2141
    %v2402 = vunpack.c.l.b16 %v2142
    %v2403 = vunpack.c.l.b16 %v2143
    %v2404 = vunpack.c.l.b16 %v2144
    %v2405 = vunpack.c.l.b16 %v2145
    %v2406 = vpack.c.b16 %v2279, %v2278
    %v2407 = vpack.c.b16 %v2281, %v2280
    %v2408 = vpack.c.b16 %v2283, %v2282
    %v2409 = vpack.c.b16 %v2285, %v2284
    %v2410 = vpack.c.b16 %v2287, %v2286
    %v2411 = vpack.c.b16 %v2289, %v2288
    %v2412 = vpack.c.b16 %v2291, %v2290
    %v2413 = vpack.c.b16 %v2293, %v2292
    %v2414 = vpack.c.b16 %v2295, %v2294
    %v2415 = vpack.c.b16 %v2297, %v2296
    %v2416 = vpack.c.b16 %v2299, %v2298
    %v2417 = vpack.c.b16 %v2301, %v2300
    %v2418 = vpack.c.b16 %v2303, %v2302
    %v2419 = vpack.c.b16 %v2305, %v2304
    %v2420 = vpack.c.b16 %v2307, %v2306
    %v2421 = vpack.c.b16 %v2309, %v2308
    %v2422 = vpack.c.b16 %v2311, %v2310
    %v2423 = vpack.c.b16 %v2313, %v2312
    %v2424 = vpack.c.b16 %v2315, %v2314
    %v2425 = vpack.c.b16 %v2317, %v2316
    %v2426 = vpack.c.b16 %v2319, %v2318
    %v2427 = vpack.c.b16 %v2321, %v2320
    %v2428 = vpack.c.b16 %v2323, %v2322
    %v2429 = vpack.c.b16 %v2325, %v2324
    %v2430 = vpack.c.b16 %v2327, %v2326
    %v2431 = vpack.c.b16 %v2329, %v2328
    %v2432 = vpack.c.b16 %v2331, %v2330
    %v2433 = vpack.c.b16 %v2333, %v2332
    %v2434 = vpack.c.b16 %v2335, %v2334
    %v2435 = vpack.c.b16 %v2337, %v2336
    %v2436 = vpack.c.b16 %v2339, %v2338
    %v2437 = vpack.c.b16 %v2341, %v2340
    %v2438 = vpack.c.b16 %v2343, %v2342
    %v2439 = vpack.c.b16 %v2345, %v2344
    %v2440 = vpack.c.b16 %v2347, %v2346
    %v2441 = vpack.c.b16 %v2349, %v2348
    %v2442 = vpack.c.b16 %v2351, %v2350
    %v2443 = vpack.c.b16 %v2353, %v2352
    %v2444 = vpack.c.b16 %v2355, %v2354
    %v2445 = vpack.c.b16 %v2357, %v2356
    %v2446 = vpack.c.b16 %v2359, %v2358
    %v2447 = vpack.c.b16 %v2361, %v2360
    %v2448 = vpack.c.b16 %v2363, %v2362
    %v2449 = vpack.c.b16 %v2365, %v2364
    %v2450 = vpack.c.b16 %v2367, %v2366
    %v2451 = vpack.c.b16 %v2369, %v2368
    %v2452 = vpack.c.b16 %v2371, %v2370
    %v2453 = vpack.c.b16 %v2373, %v2372
    %v2454 = vpack.c.b16 %v2375, %v2374
    %v2455 = vpack.c.b16 %v2377, %v2376
    %v2456 = vpack.c.b16 %v2379, %v2378
    %v2457 = vpack.c.b16 %v2381, %v2380
    %v2458 = vpack.c.b16 %v2383, %v2382
    %v2459 = vpack.c.b16 %v2385, %v2384
    %v2460 = vpack.c.b16 %v2387, %v2386
    %v2461 = vpack.c.b16 %v2389, %v2388
    %v2462 = vpack.c.b16 %v2391, %v2390
    %v2463 = vpack.c.b16 %v2393, %v2392
    %v2464 = vpack.c.b16 %v2395, %v2394
    %v2465 = vpack.c.b16 %v2397, %v2396
    %v2466 = vpack.c.b16 %v2399, %v2398
    %v2467 = vpack.c.b16 %v2401, %v2400
    %v2468 = vpack.c.b16 %v2403, %v2402
    %v2469 = vpack.c.b16 %v2405, %v2404
    %2534 = vmatpush.bf16.msra.mxu0 %v2413
    %2535 = vmatpush.bf16.msra.mxu0 %v2412
    %2536 = vmatpush.bf16.msra.mxu0 %v2411
    %2537 = vmatpush.bf16.msra.mxu0 %v2410
    %2538 = vmatpush.bf16.msra.mxu0 %v2409
    %2539 = vmatpush.bf16.msra.mxu0 %v2408
    %2540 = vmatpush.bf16.msra.mxu0 %v2407
    %2541 = vmatpush.bf16.msra.mxu0 %v2406
    %2542 = vmatmul.bf16.gmra.mxu0 %v2010
    %v2543 = vpop.f32.mrf.mxu0
    %v2544 = vadd.f32 %v2148, %v2543
    %v2545 = vpop.f32.mrf.mxu0
    %2546 = vdwg.mxu0
    %2547 = vmatpush.bf16.msra.mxu0 %v2421
    %2548 = vmatpush.bf16.msra.mxu0 %v2420
    %2549 = vmatpush.bf16.msra.mxu0 %v2419
    %2550 = vmatpush.bf16.msra.mxu0 %v2418
    %2551 = vmatpush.bf16.msra.mxu0 %v2417
    %2552 = vmatpush.bf16.msra.mxu0 %v2416
    %2553 = vmatpush.bf16.msra.mxu0 %v2415
    %2554 = vmatpush.bf16.msra.mxu0 %v2414
    %2555 = vmatmul.bf16.gmra.mxu0 %v2011
    %v2556 = vpop.f32.mrf.mxu0
    %v2557 = vadd.f32 %v2544, %v2556
    %v2558 = vpop.f32.mrf.mxu0
    %2559 = vdwg.mxu0
    %2560 = vmatpush.bf16.msra.mxu0 %v2429
    %2561 = vmatpush.bf16.msra.mxu0 %v2428
    %2562 = vmatpush.bf16.msra.mxu0 %v2427
    %2563 = vmatpush.bf16.msra.mxu0 %v2426
    %2564 = vmatpush.bf16.msra.mxu0 %v2425
    %2565 = vmatpush.bf16.msra.mxu0 %v2424
    %2566 = vmatpush.bf16.msra.mxu0 %v2423
    %2567 = vmatpush.bf16.msra.mxu0 %v2422
    %2568 = vmatmul.bf16.gmra.mxu0 %v2012
    %v2569 = vpop.f32.mrf.mxu0
    %v2570 = vadd.f32 %v2557, %v2569
    %v2571 = vpop.f32.mrf.mxu0
    %2572 = vdwg.mxu0
    %2573 = vmatpush.bf16.msra.mxu0 %v2437
    %2574 = vmatpush.bf16.msra.mxu0 %v2436
    %2575 = vmatpush.bf16.msra.mxu0 %v2435
    %2576 = vmatpush.bf16.msra.mxu0 %v2434
    %2577 = vmatpush.bf16.msra.mxu0 %v2433
    %2578 = vmatpush.bf16.msra.mxu0 %v2432
    %2579 = vmatpush.bf16.msra.mxu0 %v2431
    %2580 = vmatpush.bf16.msra.mxu0 %v2430
    %2581 = vmatmul.bf16.gmra.mxu0 %v2013
    %v2582 = vpop.f32.mrf.mxu0
    %v2583 = vadd.f32 %v2570, %v2582
    %v2584 = vpop.f32.mrf.mxu0
    %2585 = vdwg.mxu0
    %2586 = vmatpush.bf16.msra.mxu0 %v2445
    %2587 = vmatpush.bf16.msra.mxu0 %v2444
    %2588 = vmatpush.bf16.msra.mxu0 %v2443
    %2589 = vmatpush.bf16.msra.mxu0 %v2442
    %2590 = vmatpush.bf16.msra.mxu0 %v2441
    %2591 = vmatpush.bf16.msra.mxu0 %v2440
    %2592 = vmatpush.bf16.msra.mxu0 %v2439
    %2593 = vmatpush.bf16.msra.mxu0 %v2438
    %2594 = vmatmul.bf16.gmra.mxu0 %v2014
    %v2595 = vpop.f32.mrf.mxu0
    %v2596 = vadd.f32 %v2583, %v2595
    %v2597 = vpop.f32.mrf.mxu0
    %2598 = vdwg.mxu0
    %2599 = vmatpush.bf16.msra.mxu0 %v2453
    %2600 = vmatpush.bf16.msra.mxu0 %v2452
    %2601 = vmatpush.bf16.msra.mxu0 %v2451
    %2602 = vmatpush.bf16.msra.mxu0 %v2450
    %2603 = vmatpush.bf16.msra.mxu0 %v2449
    %2604 = vmatpush.bf16.msra.mxu0 %v2448
    %2605 = vmatpush.bf16.msra.mxu0 %v2447
    %2606 = vmatpush.bf16.msra.mxu0 %v2446
    %2607 = vmatmul.bf16.gmra.mxu0 %v2015
    %v2608 = vpop.f32.mrf.mxu0
    %v2609 = vadd.f32 %v2596, %v2608
    %v2610 = vpop.f32.mrf.mxu0
    %2611 = vdwg.mxu0
    %2612 = vmatpush.bf16.msra.mxu0 %v2461
    %2613 = vmatpush.bf16.msra.mxu0 %v2460
    %2614 = vmatpush.bf16.msra.mxu0 %v2459
    %2615 = vmatpush.bf16.msra.mxu0 %v2458
    %2616 = vmatpush.bf16.msra.mxu0 %v2457
    %2617 = vmatpush.bf16.msra.mxu0 %v2456
    %2618 = vmatpush.bf16.msra.mxu0 %v2455
    %2619 = vmatpush.bf16.msra.mxu0 %v2454
    %2620 = vmatmul.bf16.gmra.mxu0 %v2016
    %v2621 = vpop.f32.mrf.mxu0
    %v2622 = vadd.f32 %v2609, %v2621
    %v2623 = vpop.f32.mrf.mxu0
    %2624 = vdwg.mxu0
    %2625 = vmatpush.bf16.msra.mxu0 %v2469
    %2626 = vmatpush.bf16.msra.mxu0 %v2468
    %2627 = vmatpush.bf16.msra.mxu0 %v2467
    %2628 = vmatpush.bf16.msra.mxu0 %v2466
    %2629 = vmatpush.bf16.msra.mxu0 %v2465
    %2630 = vmatpush.bf16.msra.mxu0 %v2464
    %2631 = vmatpush.bf16.msra.mxu0 %v2463
    %2632 = vmatpush.bf16.msra.mxu0 %v2462
    %2633 = vmatmul.bf16.gmra.mxu0 %v2017
    %v2634 = vpop.f32.mrf.mxu0
    %v2635 = vadd.f32 %v2622, %v2634
    %v2636 = vpop.f32.mrf.mxu0
    %2637 = vdwg.mxu0
    %2638 = vst [vmem:[#allocation2] sm:$0x3] %v2635
    // Predicated region
    $region22: #{dueling_dqn_forward.3} parent=1 // pred_check
      _
    $region23: #{dueling_dqn_forward.3} parent=1 // pred_check_branch
      %2640 = sbr.rel (0) target = $region25
    $region24: #{dueling_dqn_forward.3} parent=1 // pred_region
      %2642 = vsyncadd [#allocation3], 0
      %s2644 = sshll.u32 [#allocation2], 4
      %s2645 = int_to_ptr.vmem [resolvable:$true] %s2644
      %s2646 = sshll.u32 %s5, 4
      %s2647 = int_to_ptr.hbm [resolvable:$true] %s2646
      %2649 = dma.vmem_to_hbm [thread:$0]  %s2645, 32, %s2647, [#allocation3]
    $region25: #{dueling_dqn_forward.3} parent=1 // pred_fallthru
      _
    // Predicated region
    $region26: #{dueling_dqn_forward.3} parent=1 // pred_check
      _
    $region27: #{dueling_dqn_forward.3} parent=1 // pred_check_branch
      %2651 = sbr.rel (0) target = $region29
    $region28: #{dueling_dqn_forward.3} parent=1 // pred_region
      %2653 = dma.done [#allocation3], 32
    $region29: #{dueling_dqn_forward.3} parent=1 // pred_fallthru
      _
    %2654 = vsyncpa [#allocation3], 1

</llo_original>
